<compile_context>
chip_gen: v5e
topology: v5e:2x2
jax: 0.10.0
libtpu: 0.0.40
codegen_flags: <defaults>
</compile_context>

<pallas_src>
import functools

import jax
import jax.numpy as jnp
from jax.experimental import pallas as pl
from jax.experimental.pallas import tpu as pltpu


def _round_up(n, m):
    return ((n + m - 1) // m) * m


def _reduced_encoder_kernel(x_ref, w1_ref, b1_ref, wh_ref, bh_ref, eps_ref,
                            out_ref, *, out_pad):
    # Cast x f32 -> bf16 IN-KERNEL (VPU).  Doing it in the wrapper would be a
    # separate un-fused XLA op: read 4B + write 2B + re-read 2B per element.
    x_bf = x_ref[...].astype(jnp.bfloat16)

    # Hidden layer: relu(x @ W1 + b1).  bf16 operands, f32 MXU accumulation.
    h = jnp.dot(x_bf, w1_ref[...], preferred_element_type=jnp.float32) + b1_ref[...]
    h = jnp.maximum(h, 0.0)

    # One fused head matmul, width = 2*out_pad (lane-dense, 128-aligned):
    #   cols [0, L)                       : mean
    #   cols [L, 2L)                      : logvar
    #   cols [2L, 2L+k)                   : mean[:, sel]
    #   cols [2L+k, out_pad)              : zero padding
    #   cols [out_pad+2L, out_pad+2L+k)   : logvar[:, sel]  (rest of 2nd half zero)
    heads = jnp.dot(h.astype(jnp.bfloat16), wh_ref[...],
                    preferred_element_type=jnp.float32) + bh_ref[...]

    a = heads[:, :out_pad]        # [mean | logvar | mean_sel   | 0]  (128-aligned slice)
    lv = heads[:, out_pad:]       # [ 0   |   0    | logvar_sel | 0]

    # eps_ref is zero outside cols [2L, 2L+k), so exp(0.5*0)=1 on every other
    # lane contributes nothing.  Single full-width unmasked store.
    out_ref[...] = a + jnp.exp(0.5 * lv) * eps_ref[...]


def reduced_encoder_forward(x_nchw, params, eps, selected_features):
    """x_nchw: [B, C, H, W] float32. Returns (mean, logvar, reduced_latent)."""
    B = x_nchw.shape[0]
    x_flat = x_nchw.reshape(B, -1).astype(jnp.float32)   # torch.nn.Flatten (NCHW row-major)
    d_in = x_flat.shape[1]

    w1, b1, wm, bm, wl, bl = params
    hidden = w1.shape[1]
    latent_dim = wm.shape[1]
    sel = jnp.asarray(selected_features, jnp.int32)
    k = int(sel.shape[0])
    two_l = 2 * latent_dim

    # Lane-dense padded widths.
    out_pad = _round_up(two_l + k, 128)   # packed output width
    head_w = 2 * out_pad                  # fused head width (two 128-aligned halves)

    # Fold the static SHAP selection into pre-sliced head columns (no in-kernel
    # gather) and zero-pad to the lane-dense layout described in the kernel.
    wh = jnp.zeros((hidden, head_w), jnp.float32)
    wh = wh.at[:, :latent_dim].set(wm)
    wh = wh.at[:, latent_dim:two_l].set(wl)
    wh = wh.at[:, two_l:two_l + k].set(wm[:, sel])
    wh = wh.at[:, out_pad + two_l:out_pad + two_l + k].set(wl[:, sel])

    bh = jnp.zeros((1, head_w), jnp.float32)
    bh = bh.at[:, :latent_dim].set(bm)
    bh = bh.at[:, latent_dim:two_l].set(bl)
    bh = bh.at[:, two_l:two_l + k].set(bm[:, sel])
    bh = bh.at[:, out_pad + two_l:out_pad + two_l + k].set(bl[:, sel])

    # eps folded into the padded output layout (zero outside cols [2L, 2L+k)).
    eps_full = jnp.zeros((B, out_pad), jnp.float32)
    eps_full = eps_full.at[:, two_l:two_l + k].set(eps.astype(jnp.float32)[:, sel])

    # Weights are small and reused every grid step -> pre-cast to bf16 once.
    # x stays f32 here; the kernel casts it (halves net HBM traffic on x).
    w1_bf = w1.astype(jnp.bfloat16)
    wh_bf = wh.astype(jnp.bfloat16)

    # Batch tiling: prefer tiles that divide B (no jnp.pad on x), cap at 256,
    # and aim for >=2 grid steps when B allows (both v7x TensorCores busy).
    if B <= 8:
        tb, bp = B, B
    else:
        bp = _round_up(B, 8)
        tb = None
        for cand in (256, 128, 64, 32, 16, 8):
            if bp % cand == 0 and bp // cand >= 2:
                tb = cand
                break
        if tb is None:
            tb = bp
    nb = bp // tb
    if bp != B:
        x_flat = jnp.pad(x_flat, ((0, bp - B), (0, 0)))
        eps_full = jnp.pad(eps_full, ((0, bp - B), (0, 0)))

    # TODO(synk): for very large d_in (real image encoders, e.g. 3*224*224) add a
    # second 'arbitrary' grid axis over d_in with an f32 VMEM accumulator for h
    # instead of loading the full (tb, d_in) row block + all of W1.

    # Explicit scoped-VMEM budget (defaults are 16 MiB v5e / 32 MiB v6e,v7x).
    vmem_need = (2 * tb * d_in * 4                          # x (f32, 2 buffers)
                 + 2 * 2 * tb * out_pad * 4                 # eps + out (2 buffers each)
                 + 2 * (d_in * hidden + hidden * head_w) * 2  # bf16 weights
                 + 2 * (hidden + head_w) * 4)                 # biases
    vmem_limit = int(min(max(2 * vmem_need, 16 << 20), 64 << 20))

    cost = pl.CostEstimate(
        flops=2 * bp * d_in * hidden + 2 * bp * hidden * head_w,
        transcendentals=bp * out_pad,
        bytes_accessed=(bp * d_in * 4 + w1_bf.size * 2 + wh_bf.size * 2
                        + b1.size * 4 + bh.size * 4
                        + 2 * bp * out_pad * 4),
    )

    kernel = functools.partial(_reduced_encoder_kernel, out_pad=out_pad)

    def _call(single_buffer_weights):
        wkw = dict(pipeline_mode=pl.Buffered(1)) if single_buffer_weights else {}
        in_specs = [
            pl.BlockSpec((tb, d_in), lambda i: (i, 0)),                 # x (batch-tiled, f32)
            pl.BlockSpec((d_in, hidden), lambda i: (0, 0), **wkw),      # W1 (resident)
            pl.BlockSpec((1, hidden), lambda i: (0, 0), **wkw),         # b1
            pl.BlockSpec((hidden, head_w), lambda i: (0, 0), **wkw),    # fused head W (resident)
            pl.BlockSpec((1, head_w), lambda i: (0, 0), **wkw),         # fused head b
            pl.BlockSpec((tb, out_pad), lambda i: (i, 0)),              # eps (padded layout)
        ]
        return pl.pallas_call(
            kernel,
            out_shape=jax.ShapeDtypeStruct((bp, out_pad), jnp.float32),
            grid=(nb,),
            in_specs=in_specs,
            out_specs=pl.BlockSpec((tb, out_pad), lambda i: (i, 0)),
            compiler_params=pltpu.CompilerParams(
                dimension_semantics=("parallel",),
                vmem_limit_bytes=vmem_limit),
            cost_estimate=cost,
        )(x_flat, w1_bf, b1, wh_bf, bh, eps_full)

    try:
        # Constant-index weight blocks: single buffer (no pointless double-buffering).
        packed = _call(True)
    except Exception:
        # Version-compat fallback if pipeline_mode=pl.Buffered(1) is not supported.
        packed = _call(False)

    mean = packed[:B, :latent_dim]
    logvar = packed[:B, latent_dim:two_l]
    reduced = packed[:B, two_l:two_l + k]
    return mean, logvar, reduced


def make_params(key, d_in, hidden, latent_dim):
    """Deterministic synthetic encoder parameters (y = x @ W + b, W stored [in, out])."""
    k1, k2, k3 = jax.random.split(key, 3)
    w1 = jax.random.normal(k1, (d_in, hidden), jnp.float32) * (1.0 / jnp.sqrt(d_in))
    b1 = jnp.zeros((1, hidden), jnp.float32)
    wm = jax.random.normal(k2, (hidden, latent_dim), jnp.float32) * (1.0 / jnp.sqrt(hidden))
    bm = jnp.zeros((1, latent_dim), jnp.float32)
    wl = jax.random.normal(k3, (hidden, latent_dim), jnp.float32) * (1.0 / jnp.sqrt(hidden))
    bl = jnp.zeros((1, latent_dim), jnp.float32)
    return (w1, b1, wm, bm, wl, bl)


if __name__ == "__main__":
    key = jax.random.PRNGKey(0)
    kx, kp, ke = jax.random.split(key, 3)

    # Small shapes consistent with the module: NCHW image batch.
    B, C, H, W = 2, 4, 16, 16
    d_in = C * H * W          # 1024
    hidden = 32
    latent_dim = 16
    selected_features = [0, 3, 5, 7, 8, 10, 12, 15]   # SHAP-selected latent dims

    x = jax.random.normal(kx, (B, C, H, W), jnp.float32)
    params = make_params(kp, d_in, hidden, latent_dim)
    eps = jax.random.normal(ke, (B, latent_dim), jnp.float32)  # deterministic reparam noise

    mean, logvar, reduced = reduced_encoder_forward(x, params, eps, selected_features)
    jax.block_until_ready((mean, logvar, reduced))

    assert mean.shape == (B, latent_dim)
    assert logvar.shape == (B, latent_dim)
    assert reduced.shape == (B, len(selected_features))

    # --- Pure-JAX references ---
    x_flat = x.reshape(B, -1)
    w1, b1, wm, bm, wl, bl = params
    sel = jnp.asarray(selected_features)

    # (a) bf16-matched reference (same dtype pipeline as the kernel) — tight check.
    xb = x_flat.astype(jnp.bfloat16)
    w1b = w1.astype(jnp.bfloat16)
    hb = jnp.maximum(
        jnp.dot(xb, w1b, preferred_element_type=jnp.float32) + b1, 0.0)
    whb = jnp.concatenate([wm, wl], axis=1).astype(jnp.bfloat16)
    headb = jnp.dot(hb.astype(jnp.bfloat16), whb,
                    preferred_element_type=jnp.float32) + jnp.concatenate([bm, bl], axis=1)
    mean_b = headb[:, :latent_dim]
    logvar_b = headb[:, latent_dim:]
    red_b = mean_b[:, sel] + jnp.exp(0.5 * logvar_b[:, sel]) * eps[:, sel]
    assert jnp.allclose(mean, mean_b, atol=2e-2, rtol=2e-2)
    assert jnp.allclose(logvar, logvar_b, atol=2e-2, rtol=2e-2)
    assert jnp.allclose(reduced, red_b, atol=2e-2, rtol=2e-2)

    # (b) full-f32 reference (module semantics) — loose check (bf16 matmul operands).
    h_ref = jnp.maximum(x_flat @ w1 + b1, 0.0)
    mean_ref = h_ref @ wm + bm
    logvar_ref = h_ref @ wl + bl
    latent_ref = mean_ref + jnp.exp(0.5 * logvar_ref) * eps
    red_ref = latent_ref[:, sel]
    assert jnp.allclose(mean, mean_ref, atol=1e-1, rtol=1e-1)
    assert jnp.allclose(logvar, logvar_ref, atol=1e-1, rtol=1e-1)
    assert jnp.allclose(reduced, red_ref, atol=1e-1, rtol=1e-1)

    print("KERNEL_OK")
</pallas_src>

<mosaic_0001>
module attributes {stable_mosaic.version = 11 : i64} {
  func.func @_reduced_encoder_kernel(%arg0: i32, %arg1: memref<2x1024xf32, #tpu.memory_space<vmem>>, %arg2: memref<1024x32xbf16, #tpu.memory_space<vmem>>, %arg3: memref<1x32xf32, #tpu.memory_space<vmem>>, %arg4: memref<32x256xbf16, #tpu.memory_space<vmem>>, %arg5: memref<1x256xf32, #tpu.memory_space<vmem>>, %arg6: memref<2x128xf32, #tpu.memory_space<vmem>>, %arg7: memref<2x128xf32, #tpu.memory_space<vmem>>) attributes {dimension_semantics = [#tpu.dimension_semantics<parallel>], iteration_bounds = array<i64: 1>, scalar_prefetch = 0 : i64, scratch_operands = 0 : i64, tpu.core_type = #tpu.core_type<tc>, window_params = [{transform_indices = @transform_0, window_bounds = array<i64: 2, 1024>}, {pipeline_mode = #tpu.pipeline_mode<synchronous>, transform_indices = @transform_1, window_bounds = array<i64: 1024, 32>}, {pipeline_mode = #tpu.pipeline_mode<synchronous>, transform_indices = @transform_2, window_bounds = array<i64: 1, 32>}, {pipeline_mode = #tpu.pipeline_mode<synchronous>, transform_indices = @transform_3, window_bounds = array<i64: 32, 256>}, {pipeline_mode = #tpu.pipeline_mode<synchronous>, transform_indices = @transform_4, window_bounds = array<i64: 1, 256>}, {transform_indices = @transform_5, window_bounds = array<i64: 2, 128>}, {transform_indices = @transform_6, window_bounds = array<i64: 2, 128>}]} {
    %c0 = arith.constant 0 : index
    %c0_0 = arith.constant 0 : index
    %0 = vector.load %arg1[%c0, %c0_0] : memref<2x1024xf32, #tpu.memory_space<vmem>>, vector<2x1024xf32>
    %1 = arith.truncf %0 : vector<2x1024xf32> to vector<2x1024xbf16>
    %c0_1 = arith.constant 0 : index
    %c0_2 = arith.constant 0 : index
    %2 = vector.load %arg2[%c0_1, %c0_2] : memref<1024x32xbf16, #tpu.memory_space<vmem>>, vector<1024x32xbf16>
    %cst = arith.constant dense<0.000000e+00> : vector<2x32xf32>
    %3 = tpu.matmul %1, %2, %cst {dimension_numbers = #tpu.dot_dimension_numbers<[1], [0], [0], [1], [0, 0, 1, 1], [], []>} : vector<2x1024xbf16>, vector<1024x32xbf16>, vector<2x32xf32> -> vector<2x32xf32>
    %c0_3 = arith.constant 0 : index
    %c0_4 = arith.constant 0 : index
    %4 = vector.load %arg3[%c0_3, %c0_4] : memref<1x32xf32, #tpu.memory_space<vmem>>, vector<1x32xf32>
    %5 = vector.broadcast %4 : vector<1x32xf32> to vector<2x32xf32>
    %6 = arith.addf %3, %5 : vector<2x32xf32>
    %cst_5 = arith.constant 0.000000e+00 : f32
    %7 = vector.broadcast %cst_5 : f32 to vector<2x32xf32>
    %8 = arith.maximumf %6, %7 : vector<2x32xf32>
    %9 = arith.truncf %8 : vector<2x32xf32> to vector<2x32xbf16>
    %c0_6 = arith.constant 0 : index
    %c0_7 = arith.constant 0 : index
    %10 = vector.load %arg4[%c0_6, %c0_7] : memref<32x256xbf16, #tpu.memory_space<vmem>>, vector<32x256xbf16>
    %cst_8 = arith.constant dense<0.000000e+00> : vector<2x256xf32>
    %11 = tpu.matmul %9, %10, %cst_8 {dimension_numbers = #tpu.dot_dimension_numbers<[1], [0], [0], [1], [0, 0, 1, 1], [], []>} : vector<2x32xbf16>, vector<32x256xbf16>, vector<2x256xf32> -> vector<2x256xf32>
    %c0_9 = arith.constant 0 : index
    %c0_10 = arith.constant 0 : index
    %12 = vector.load %arg5[%c0_9, %c0_10] : memref<1x256xf32, #tpu.memory_space<vmem>>, vector<1x256xf32>
    %13 = vector.broadcast %12 : vector<1x256xf32> to vector<2x256xf32>
    %14 = arith.addf %11, %13 : vector<2x256xf32>
    %15 = vector.extract_strided_slice %14 {offsets = [0, 0], sizes = [2, 128], strides = [1, 1]} : vector<2x256xf32> to vector<2x128xf32>
    %16 = vector.extract_strided_slice %14 {offsets = [0, 128], sizes = [2, 128], strides = [1, 1]} : vector<2x256xf32> to vector<2x128xf32>
    %cst_11 = arith.constant 5.000000e-01 : f32
    %17 = vector.broadcast %cst_11 : f32 to vector<2x128xf32>
    %18 = arith.mulf %17, %16 : vector<2x128xf32>
    %19 = math.exp %18 : vector<2x128xf32>
    %c0_12 = arith.constant 0 : index
    %c0_13 = arith.constant 0 : index
    %20 = vector.load %arg6[%c0_12, %c0_13] : memref<2x128xf32, #tpu.memory_space<vmem>>, vector<2x128xf32>
    %21 = arith.mulf %19, %20 : vector<2x128xf32>
    %22 = arith.addf %15, %21 : vector<2x128xf32>
    %c0_14 = arith.constant 0 : index
    %c0_15 = arith.constant 0 : index
    %23 = vector.load %arg7[%c0_14, %c0_15] : memref<2x128xf32, #tpu.memory_space<vmem>>, vector<2x128xf32>
    tpu.vector_store %arg7[%c0_14, %c0_15], %22 {strides = array<i32>} : memref<2x128xf32, #tpu.memory_space<vmem>>, vector<2x128xf32>,
    return
  }
  func.func @transform_0(%arg0: i32) -> (i32, i32) {
    %c0_i32 = arith.constant 0 : i32
    %c0_i32_0 = arith.constant 0 : i32
    return %arg0, %c0_i32 : i32, i32
  }
  func.func @transform_1(%arg0: i32) -> (i32, i32) {
    %c0_i32 = arith.constant 0 : i32
    %c0_i32_0 = arith.constant 0 : i32
    %c0_i32_1 = arith.constant 0 : i32
    return %c0_i32, %c0_i32_0 : i32, i32
  }
  func.func @transform_2(%arg0: i32) -> (i32, i32) {
    %c0_i32 = arith.constant 0 : i32
    %c0_i32_0 = arith.constant 0 : i32
    %c0_i32_1 = arith.constant 0 : i32
    return %c0_i32, %c0_i32_0 : i32, i32
  }
  func.func @transform_3(%arg0: i32) -> (i32, i32) {
    %c0_i32 = arith.constant 0 : i32
    %c0_i32_0 = arith.constant 0 : i32
    %c0_i32_1 = arith.constant 0 : i32
    return %c0_i32, %c0_i32_0 : i32, i32
  }
  func.func @transform_4(%arg0: i32) -> (i32, i32) {
    %c0_i32 = arith.constant 0 : i32
    %c0_i32_0 = arith.constant 0 : i32
    %c0_i32_1 = arith.constant 0 : i32
    return %c0_i32, %c0_i32_0 : i32, i32
  }
  func.func @transform_5(%arg0: i32) -> (i32, i32) {
    %c0_i32 = arith.constant 0 : i32
    %c0_i32_0 = arith.constant 0 : i32
    return %arg0, %c0_i32 : i32, i32
  }
  func.func @transform_6(%arg0: i32) -> (i32, i32) {
    %c0_i32 = arith.constant 0 : i32
    %c0_i32_0 = arith.constant 0 : i32
    return %arg0, %c0_i32 : i32, i32
  }
}

module attributes {stable_mosaic.version = 11 : i64} {
  func.func @_reduced_encoder_kernel(%arg0: i32, %arg1: memref<2x1024xf32, #tpu.memory_space<vmem>>, %arg2: memref<1024x32xbf16, #tpu.memory_space<vmem>>, %arg3: memref<1x32xf32, #tpu.memory_space<vmem>>, %arg4: memref<32x256xbf16, #tpu.memory_space<vmem>>, %arg5: memref<1x256xf32, #tpu.memory_space<vmem>>, %arg6: memref<2x128xf32, #tpu.memory_space<vmem>>, %arg7: memref<2x128xf32, #tpu.memory_space<vmem>>) attributes {dimension_semantics = [#tpu.dimension_semantics<parallel>], iteration_bounds = array<i64: 1>, scalar_prefetch = 0 : i64, scratch_operands = 0 : i64, tpu.core_type = #tpu.core_type<tc>, window_params = [{transform_indices = @transform_0, window_bounds = array<i64: 2, 1024>}, {pipeline_mode = #tpu.pipeline_mode<synchronous>, transform_indices = @transform_1, window_bounds = array<i64: 1024, 32>}, {pipeline_mode = #tpu.pipeline_mode<synchronous>, transform_indices = @transform_2, window_bounds = array<i64: 1, 32>}, {pipeline_mode = #tpu.pipeline_mode<synchronous>, transform_indices = @transform_3, window_bounds = array<i64: 32, 256>}, {pipeline_mode = #tpu.pipeline_mode<synchronous>, transform_indices = @transform_4, window_bounds = array<i64: 1, 256>}, {transform_indices = @transform_5, window_bounds = array<i64: 2, 128>}, {transform_indices = @transform_6, window_bounds = array<i64: 2, 128>}]} {
    %c0 = arith.constant 0 : index
    %c0_0 = arith.constant 0 : index
    %0 = vector.load %arg1[%c0, %c0_0] : memref<2x1024xf32, #tpu.memory_space<vmem>>, vector<2x1024xf32>
    %1 = arith.truncf %0 : vector<2x1024xf32> to vector<2x1024xbf16>
    %c0_1 = arith.constant 0 : index
    %c0_2 = arith.constant 0 : index
    %2 = vector.load %arg2[%c0_1, %c0_2] : memref<1024x32xbf16, #tpu.memory_space<vmem>>, vector<1024x32xbf16>
    %cst = arith.constant dense<0.000000e+00> : vector<2x32xf32>
    %3 = tpu.matmul %1, %2, %cst {dimension_numbers = #tpu.dot_dimension_numbers<[1], [0], [0], [1], [0, 0, 1, 1], [], []>} : vector<2x1024xbf16>, vector<1024x32xbf16>, vector<2x32xf32> -> vector<2x32xf32>
    %c0_3 = arith.constant 0 : index
    %c0_4 = arith.constant 0 : index
    %4 = vector.load %arg3[%c0_3, %c0_4] : memref<1x32xf32, #tpu.memory_space<vmem>>, vector<1x32xf32>
    %5 = vector.broadcast %4 : vector<1x32xf32> to vector<2x32xf32>
    %6 = arith.addf %3, %5 : vector<2x32xf32>
    %cst_5 = arith.constant 0.000000e+00 : f32
    %7 = vector.broadcast %cst_5 : f32 to vector<2x32xf32>
    %8 = arith.maximumf %6, %7 : vector<2x32xf32>
    %9 = arith.truncf %8 : vector<2x32xf32> to vector<2x32xbf16>
    %c0_6 = arith.constant 0 : index
    %c0_7 = arith.constant 0 : index
    %10 = vector.load %arg4[%c0_6, %c0_7] : memref<32x256xbf16, #tpu.memory_space<vmem>>, vector<32x256xbf16>
    %cst_8 = arith.constant dense<0.000000e+00> : vector<2x256xf32>
    %11 = tpu.matmul %9, %10, %cst_8 {dimension_numbers = #tpu.dot_dimension_numbers<[1], [0], [0], [1], [0, 0, 1, 1], [], []>} : vector<2x32xbf16>, vector<32x256xbf16>, vector<2x256xf32> -> vector<2x256xf32>
    %c0_9 = arith.constant 0 : index
    %c0_10 = arith.constant 0 : index
    %12 = vector.load %arg5[%c0_9, %c0_10] : memref<1x256xf32, #tpu.memory_space<vmem>>, vector<1x256xf32>
    %13 = vector.broadcast %12 : vector<1x256xf32> to vector<2x256xf32>
    %14 = arith.addf %11, %13 : vector<2x256xf32>
    %15 = vector.extract_strided_slice %14 {offsets = [0, 0], sizes = [2, 128], strides = [1, 1]} : vector<2x256xf32> to vector<2x128xf32>
    %16 = vector.extract_strided_slice %14 {offsets = [0, 128], sizes = [2, 128], strides = [1, 1]} : vector<2x256xf32> to vector<2x128xf32>
    %cst_11 = arith.constant 5.000000e-01 : f32
    %17 = vector.broadcast %cst_11 : f32 to vector<2x128xf32>
    %18 = arith.mulf %17, %16 : vector<2x128xf32>
    %19 = math.exp %18 : vector<2x128xf32>
    %c0_12 = arith.constant 0 : index
    %c0_13 = arith.constant 0 : index
    %20 = vector.load %arg6[%c0_12, %c0_13] : memref<2x128xf32, #tpu.memory_space<vmem>>, vector<2x128xf32>
    %21 = arith.mulf %19, %20 : vector<2x128xf32>
    %22 = arith.addf %15, %21 : vector<2x128xf32>
    %c0_14 = arith.constant 0 : index
    %c0_15 = arith.constant 0 : index
    %23 = vector.load %arg7[%c0_14, %c0_15] : memref<2x128xf32, #tpu.memory_space<vmem>>, vector<2x128xf32>
    tpu.vector_store %arg7[%c0_14, %c0_15], %22 {strides = array<i32>} : memref<2x128xf32, #tpu.memory_space<vmem>>, vector<2x128xf32>,
    return
  }
  func.func @transform_0(%arg0: i32) -> (i32, i32) {
    %c0_i32 = arith.constant 0 : i32
    %c0_i32_0 = arith.constant 0 : i32
    return %arg0, %c0_i32 : i32, i32
  }
  func.func @transform_1(%arg0: i32) -> (i32, i32) {
    %c0_i32 = arith.constant 0 : i32
    %c0_i32_0 = arith.constant 0 : i32
    %c0_i32_1 = arith.constant 0 : i32
    return %c0_i32, %c0_i32_0 : i32, i32
  }
  func.func @transform_2(%arg0: i32) -> (i32, i32) {
    %c0_i32 = arith.constant 0 : i32
    %c0_i32_0 = arith.constant 0 : i32
    %c0_i32_1 = arith.constant 0 : i32
    return %c0_i32, %c0_i32_0 : i32, i32
  }
  func.func @transform_3(%arg0: i32) -> (i32, i32) {
    %c0_i32 = arith.constant 0 : i32
    %c0_i32_0 = arith.constant 0 : i32
    %c0_i32_1 = arith.constant 0 : i32
    return %c0_i32, %c0_i32_0 : i32, i32
  }
  func.func @transform_4(%arg0: i32) -> (i32, i32) {
    %c0_i32 = arith.constant 0 : i32
    %c0_i32_0 = arith.constant 0 : i32
    %c0_i32_1 = arith.constant 0 : i32
    return %c0_i32, %c0_i32_0 : i32, i32
  }
  func.func @transform_5(%arg0: i32) -> (i32, i32) {
    %c0_i32 = arith.constant 0 : i32
    %c0_i32_0 = arith.constant 0 : i32
    return %arg0, %c0_i32 : i32, i32
  }
  func.func @transform_6(%arg0: i32) -> (i32, i32) {
    %c0_i32 = arith.constant 0 : i32
    %c0_i32_0 = arith.constant 0 : i32
    return %arg0, %c0_i32 : i32, i32
  }
}

</mosaic_0001>

<llo_original>
// kernel: tpu_custom_call.1
$region0: #{tpu_custom_call.1}
  #allocation0 [shape = 'u32[]', space=smem, size = 0x4, offset = 0x4, fixed_abs, tag = 'smem constant byte address 0x4 - core index']
  #allocation1 [shape = 'u32[72,128]{1,0:T(1,128)}', space=vmem, size = 0x9000, scoped, tag = 'internal scratch']
  %s0 = inlined_call_operand.vmem [shape: f32[2,1024], index: 0, kind: input, shape index: {}]
  %s1 = inlined_call_operand.vmem [shape: bf16[1024,32], index: 1, kind: input, shape index: {}]
  %s2 = inlined_call_operand.vmem [shape: f32[1,32], index: 2, kind: input, shape index: {}]
  %s3 = inlined_call_operand.vmem [shape: bf16[32,256], index: 3, kind: input, shape index: {}]
  %s4 = inlined_call_operand.vmem [shape: f32[1,256], index: 4, kind: input, shape index: {}]
  %s5 = inlined_call_operand.vmem [shape: f32[2,128], index: 5, kind: input, shape index: {}]
  %s6 = inlined_call_operand.hbm [shape: f32[2,128], index: 6, kind: output, shape index: {}]
  %s7 = sld [smem:[#allocation0]]
  $region34: #{tpu_custom_call.1} parent=0
    _
  %s9 = ssub.s32 1, %s7
  %s10 = scalar_select 0, %s9, %s7
  $region1: #{tpu_custom_call.1} parent=0
    #allocation2 [shape = 'u8[1024]{0}', space=vmem, size = 0x400, scoped, tag = 'output window, operand 0, single buffered']
    #allocation3 [shape = 's32[1]{0}', space=sflag, size = 0x4, scoped, tag = 'scoped memory for tpu_custom_call.1']
    %11 = vsyncpa [#allocation3], 0
    // Predicated region
    $region2: #{tpu_custom_call.1} parent=1 // pred_check
      _
    $region3: #{tpu_custom_call.1} parent=1 // pred_check_branch
      %13 = sbr.rel (0) target = $region5
    $region4: #{tpu_custom_call.1} parent=1 // pred_region
      _
    $region5: #{tpu_custom_call.1} parent=1 // pred_fallthru
      _
    // Predicated region
    $region6: #{tpu_custom_call.1} parent=1 // pred_check
      _
    $region7: #{tpu_custom_call.1} parent=1 // pred_check_branch
      %15 = sbr.rel (0) target = $region9
    $region8: #{tpu_custom_call.1} parent=1 // pred_region
      _
    $region9: #{tpu_custom_call.1} parent=1 // pred_fallthru
      _
    // Predicated region
    $region10: #{tpu_custom_call.1} parent=1 // pred_check
      _
    $region11: #{tpu_custom_call.1} parent=1 // pred_check_branch
      %17 = sbr.rel (0) target = $region13
    $region12: #{tpu_custom_call.1} parent=1 // pred_region
      _
    $region13: #{tpu_custom_call.1} parent=1 // pred_fallthru
      _
    // Predicated region
    $region14: #{tpu_custom_call.1} parent=1 // pred_check
      _
    $region15: #{tpu_custom_call.1} parent=1 // pred_check_branch
      %19 = sbr.rel (0) target = $region17
    $region16: #{tpu_custom_call.1} parent=1 // pred_region
      _
    $region17: #{tpu_custom_call.1} parent=1 // pred_fallthru
      _
    // Predicated region
    $region18: #{tpu_custom_call.1} parent=1 // pred_check
      _
    $region19: #{tpu_custom_call.1} parent=1 // pred_check_branch
      %21 = sbr.rel (0) target = $region21
    $region20: #{tpu_custom_call.1} parent=1 // pred_region
      _
    $region21: #{tpu_custom_call.1} parent=1 // pred_fallthru
      _
    // Predicated region
    $region22: #{tpu_custom_call.1} parent=1 // pred_check
      _
    $region23: #{tpu_custom_call.1} parent=1 // pred_check_branch
      %23 = sbr.rel (0) target = $region25
    $region24: #{tpu_custom_call.1} parent=1 // pred_region
      _
    $region25: #{tpu_custom_call.1} parent=1 // pred_fallthru
      _
    %v25 = vld [vmem:[%s0] sm:$0xff]
    %v26 = vld [vmem:[%s0 + $0x8] sm:$0xff]
    %29 = vst [vmem:[#allocation1] ss:$4 sm:$0xff] %v25
    %s30 = scalar_lea.vmem [#allocation1], 32
    %31 = vst [vmem:[%s30] ss:$4 sm:$0xff] %v26
    %v32 = vld.sshfl [vmem:[#allocation1] sm:$0xff pattern:$0x73625140]
    %v33 = vld.sshfl [vmem:[#allocation1 + $0x8] sm:$0xff pattern:$0x73625140]
    %v34 = vld.sshfl [vmem:[#allocation1 + $0x10] sm:$0xff pattern:$0x73625140]
    %v35 = vld.sshfl [vmem:[#allocation1 + $0x18] sm:$0xff pattern:$0x73625140]
    %v36 = vld.sshfl [vmem:[#allocation1 + $0x20] sm:$0xff pattern:$0x73625140]
    %v37 = vld.sshfl [vmem:[#allocation1 + $0x28] sm:$0xff pattern:$0x73625140]
    %v38 = vld.sshfl [vmem:[#allocation1 + $0x30] sm:$0xff pattern:$0x73625140]
    %v39 = vld.sshfl [vmem:[#allocation1 + $0x38] sm:$0xff pattern:$0x73625140]
    %v48 = vpack.c.bf16 %v32, %v32
    %v49 = vpack.c.bf16 %v33, %v33
    %v50 = vpack.c.bf16 %v34, %v34
    %v51 = vpack.c.bf16 %v35, %v35
    %v52 = vpack.c.bf16 %v36, %v36
    %v53 = vpack.c.bf16 %v37, %v37
    %v54 = vpack.c.bf16 %v38, %v38
    %v55 = vpack.c.bf16 %v39, %v39
    %v56 = vld [vmem:[%s1] sm:$0xf]
    %v57 = vld [vmem:[%s1 + $0x4] sm:$0xf]
    %v58 = vld [vmem:[%s1 + $0x8] sm:$0xf]
    %v59 = vld [vmem:[%s1 + $0xc] sm:$0xf]
    %v60 = vld [vmem:[%s1 + $0x10] sm:$0xf]
    %v61 = vld [vmem:[%s1 + $0x14] sm:$0xf]
    %v62 = vld [vmem:[%s1 + $0x18] sm:$0xf]
    %v63 = vld [vmem:[%s1 + $0x1c] sm:$0xf]
    %v64 = vld [vmem:[%s1 + $0x20] sm:$0xf]
    %v65 = vld [vmem:[%s1 + $0x24] sm:$0xf]
    %v66 = vld [vmem:[%s1 + $0x28] sm:$0xf]
    %v67 = vld [vmem:[%s1 + $0x2c] sm:$0xf]
    %v68 = vld [vmem:[%s1 + $0x30] sm:$0xf]
    %v69 = vld [vmem:[%s1 + $0x34] sm:$0xf]
    %v70 = vld [vmem:[%s1 + $0x38] sm:$0xf]
    %v71 = vld [vmem:[%s1 + $0x3c] sm:$0xf]
    %v72 = vld [vmem:[%s1 + $0x40] sm:$0xf]
    %v73 = vld [vmem:[%s1 + $0x44] sm:$0xf]
    %v74 = vld [vmem:[%s1 + $0x48] sm:$0xf]
    %v75 = vld [vmem:[%s1 + $0x4c] sm:$0xf]
    %v76 = vld [vmem:[%s1 + $0x50] sm:$0xf]
    %v77 = vld [vmem:[%s1 + $0x54] sm:$0xf]
    %v78 = vld [vmem:[%s1 + $0x58] sm:$0xf]
    %v79 = vld [vmem:[%s1 + $0x5c] sm:$0xf]
    %v80 = vld [vmem:[%s1 + $0x60] sm:$0xf]
    %v81 = vld [vmem:[%s1 + $0x64] sm:$0xf]
    %v82 = vld [vmem:[%s1 + $0x68] sm:$0xf]
    %v83 = vld [vmem:[%s1 + $0x6c] sm:$0xf]
    %v84 = vld [vmem:[%s1 + $0x70] sm:$0xf]
    %v85 = vld [vmem:[%s1 + $0x74] sm:$0xf]
    %v86 = vld [vmem:[%s1 + $0x78] sm:$0xf]
    %v87 = vld [vmem:[%s1 + $0x7c] sm:$0xf]
    %v88 = vld [vmem:[%s1 + $0x80] sm:$0xf]
    %v89 = vld [vmem:[%s1 + $0x84] sm:$0xf]
    %v90 = vld [vmem:[%s1 + $0x88] sm:$0xf]
    %v91 = vld [vmem:[%s1 + $0x8c] sm:$0xf]
    %v92 = vld [vmem:[%s1 + $0x90] sm:$0xf]
    %v93 = vld [vmem:[%s1 + $0x94] sm:$0xf]
    %v94 = vld [vmem:[%s1 + $0x98] sm:$0xf]
    %v95 = vld [vmem:[%s1 + $0x9c] sm:$0xf]
    %v96 = vld [vmem:[%s1 + $0xa0] sm:$0xf]
    %v97 = vld [vmem:[%s1 + $0xa4] sm:$0xf]
    %v98 = vld [vmem:[%s1 + $0xa8] sm:$0xf]
    %v99 = vld [vmem:[%s1 + $0xac] sm:$0xf]
    %v100 = vld [vmem:[%s1 + $0xb0] sm:$0xf]
    %v101 = vld [vmem:[%s1 + $0xb4] sm:$0xf]
    %v102 = vld [vmem:[%s1 + $0xb8] sm:$0xf]
    %v103 = vld [vmem:[%s1 + $0xbc] sm:$0xf]
    %v104 = vld [vmem:[%s1 + $0xc0] sm:$0xf]
    %v105 = vld [vmem:[%s1 + $0xc4] sm:$0xf]
    %v106 = vld [vmem:[%s1 + $0xc8] sm:$0xf]
    %v107 = vld [vmem:[%s1 + $0xcc] sm:$0xf]
    %v108 = vld [vmem:[%s1 + $0xd0] sm:$0xf]
    %v109 = vld [vmem:[%s1 + $0xd4] sm:$0xf]
    %v110 = vld [vmem:[%s1 + $0xd8] sm:$0xf]
    %v111 = vld [vmem:[%s1 + $0xdc] sm:$0xf]
    %v112 = vld [vmem:[%s1 + $0xe0] sm:$0xf]
    %v113 = vld [vmem:[%s1 + $0xe4] sm:$0xf]
    %v114 = vld [vmem:[%s1 + $0xe8] sm:$0xf]
    %v115 = vld [vmem:[%s1 + $0xec] sm:$0xf]
    %v116 = vld [vmem:[%s1 + $0xf0] sm:$0xf]
    %v117 = vld [vmem:[%s1 + $0xf4] sm:$0xf]
    %v118 = vld [vmem:[%s1 + $0xf8] sm:$0xf]
    %v119 = vld [vmem:[%s1 + $0xfc] sm:$0xf]
    %v120 = vld [vmem:[%s1 + $0x100] sm:$0xf]
    %v121 = vld [vmem:[%s1 + $0x104] sm:$0xf]
    %v122 = vld [vmem:[%s1 + $0x108] sm:$0xf]
    %v123 = vld [vmem:[%s1 + $0x10c] sm:$0xf]
    %v124 = vld [vmem:[%s1 + $0x110] sm:$0xf]
    %v125 = vld [vmem:[%s1 + $0x114] sm:$0xf]
    %v126 = vld [vmem:[%s1 + $0x118] sm:$0xf]
    %v127 = vld [vmem:[%s1 + $0x11c] sm:$0xf]
    %v128 = vld [vmem:[%s1 + $0x120] sm:$0xf]
    %v129 = vld [vmem:[%s1 + $0x124] sm:$0xf]
    %v130 = vld [vmem:[%s1 + $0x128] sm:$0xf]
    %v131 = vld [vmem:[%s1 + $0x12c] sm:$0xf]
    %v132 = vld [vmem:[%s1 + $0x130] sm:$0xf]
    %v133 = vld [vmem:[%s1 + $0x134] sm:$0xf]
    %v134 = vld [vmem:[%s1 + $0x138] sm:$0xf]
    %v135 = vld [vmem:[%s1 + $0x13c] sm:$0xf]
    %v136 = vld [vmem:[%s1 + $0x140] sm:$0xf]
    %v137 = vld [vmem:[%s1 + $0x144] sm:$0xf]
    %v138 = vld [vmem:[%s1 + $0x148] sm:$0xf]
    %v139 = vld [vmem:[%s1 + $0x14c] sm:$0xf]
    %v140 = vld [vmem:[%s1 + $0x150] sm:$0xf]
    %v141 = vld [vmem:[%s1 + $0x154] sm:$0xf]
    %v142 = vld [vmem:[%s1 + $0x158] sm:$0xf]
    %v143 = vld [vmem:[%s1 + $0x15c] sm:$0xf]
    %v144 = vld [vmem:[%s1 + $0x160] sm:$0xf]
    %v145 = vld [vmem:[%s1 + $0x164] sm:$0xf]
    %v146 = vld [vmem:[%s1 + $0x168] sm:$0xf]
    %v147 = vld [vmem:[%s1 + $0x16c] sm:$0xf]
    %v148 = vld [vmem:[%s1 + $0x170] sm:$0xf]
    %v149 = vld [vmem:[%s1 + $0x174] sm:$0xf]
    %v150 = vld [vmem:[%s1 + $0x178] sm:$0xf]
    %v151 = vld [vmem:[%s1 + $0x17c] sm:$0xf]
    %v152 = vld [vmem:[%s1 + $0x180] sm:$0xf]
    %v153 = vld [vmem:[%s1 + $0x184] sm:$0xf]
    %v154 = vld [vmem:[%s1 + $0x188] sm:$0xf]
    %v155 = vld [vmem:[%s1 + $0x18c] sm:$0xf]
    %v156 = vld [vmem:[%s1 + $0x190] sm:$0xf]
    %v157 = vld [vmem:[%s1 + $0x194] sm:$0xf]
    %v158 = vld [vmem:[%s1 + $0x198] sm:$0xf]
    %v159 = vld [vmem:[%s1 + $0x19c] sm:$0xf]
    %v160 = vld [vmem:[%s1 + $0x1a0] sm:$0xf]
    %v161 = vld [vmem:[%s1 + $0x1a4] sm:$0xf]
    %v162 = vld [vmem:[%s1 + $0x1a8] sm:$0xf]
    %v163 = vld [vmem:[%s1 + $0x1ac] sm:$0xf]
    %v164 = vld [vmem:[%s1 + $0x1b0] sm:$0xf]
    %v165 = vld [vmem:[%s1 + $0x1b4] sm:$0xf]
    %v166 = vld [vmem:[%s1 + $0x1b8] sm:$0xf]
    %v167 = vld [vmem:[%s1 + $0x1bc] sm:$0xf]
    %v168 = vld [vmem:[%s1 + $0x1c0] sm:$0xf]
    %v169 = vld [vmem:[%s1 + $0x1c4] sm:$0xf]
    %v170 = vld [vmem:[%s1 + $0x1c8] sm:$0xf]
    %v171 = vld [vmem:[%s1 + $0x1cc] sm:$0xf]
    %v172 = vld [vmem:[%s1 + $0x1d0] sm:$0xf]
    %v173 = vld [vmem:[%s1 + $0x1d4] sm:$0xf]
    %v174 = vld [vmem:[%s1 + $0x1d8] sm:$0xf]
    %v175 = vld [vmem:[%s1 + $0x1dc] sm:$0xf]
    %v176 = vld [vmem:[%s1 + $0x1e0] sm:$0xf]
    %v177 = vld [vmem:[%s1 + $0x1e4] sm:$0xf]
    %v178 = vld [vmem:[%s1 + $0x1e8] sm:$0xf]
    %v179 = vld [vmem:[%s1 + $0x1ec] sm:$0xf]
    %v180 = vld [vmem:[%s1 + $0x1f0] sm:$0xf]
    %v181 = vld [vmem:[%s1 + $0x1f4] sm:$0xf]
    %v182 = vld [vmem:[%s1 + $0x1f8] sm:$0xf]
    %v183 = vld [vmem:[%s1 + $0x1fc] sm:$0xf]
    %v184 = vld [vmem:[%s2] sm:$0x1]
    %v186 = vperm.slane %v184, 0
    %v316 = vunpack.c.l.b16 %v56
    %v317 = vunpack.c.l.b16 %v57
    %v318 = vunpack.c.l.b16 %v58
    %v319 = vunpack.c.l.b16 %v59
    %v320 = vunpack.c.l.b16 %v60
    %v321 = vunpack.c.l.b16 %v61
    %v322 = vunpack.c.l.b16 %v62
    %v323 = vunpack.c.l.b16 %v63
    %v324 = vunpack.c.l.b16 %v64
    %v325 = vunpack.c.l.b16 %v65
    %v326 = vunpack.c.l.b16 %v66
    %v327 = vunpack.c.l.b16 %v67
    %v328 = vunpack.c.l.b16 %v68
    %v329 = vunpack.c.l.b16 %v69
    %v330 = vunpack.c.l.b16 %v70
    %v331 = vunpack.c.l.b16 %v71
    %v332 = vunpack.c.l.b16 %v72
    %v333 = vunpack.c.l.b16 %v73
    %v334 = vunpack.c.l.b16 %v74
    %v335 = vunpack.c.l.b16 %v75
    %v336 = vunpack.c.l.b16 %v76
    %v337 = vunpack.c.l.b16 %v77
    %v338 = vunpack.c.l.b16 %v78
    %v339 = vunpack.c.l.b16 %v79
    %v340 = vunpack.c.l.b16 %v80
    %v341 = vunpack.c.l.b16 %v81
    %v342 = vunpack.c.l.b16 %v82
    %v343 = vunpack.c.l.b16 %v83
    %v344 = vunpack.c.l.b16 %v84
    %v345 = vunpack.c.l.b16 %v85
    %v346 = vunpack.c.l.b16 %v86
    %v347 = vunpack.c.l.b16 %v87
    %v348 = vunpack.c.l.b16 %v88
    %v349 = vunpack.c.l.b16 %v89
    %v350 = vunpack.c.l.b16 %v90
    %v351 = vunpack.c.l.b16 %v91
    %v352 = vunpack.c.l.b16 %v92
    %v353 = vunpack.c.l.b16 %v93
    %v354 = vunpack.c.l.b16 %v94
    %v355 = vunpack.c.l.b16 %v95
    %v356 = vunpack.c.l.b16 %v96
    %v357 = vunpack.c.l.b16 %v97
    %v358 = vunpack.c.l.b16 %v98
    %v359 = vunpack.c.l.b16 %v99
    %v360 = vunpack.c.l.b16 %v100
    %v361 = vunpack.c.l.b16 %v101
    %v362 = vunpack.c.l.b16 %v102
    %v363 = vunpack.c.l.b16 %v103
    %v364 = vunpack.c.l.b16 %v104
    %v365 = vunpack.c.l.b16 %v105
    %v366 = vunpack.c.l.b16 %v106
    %v367 = vunpack.c.l.b16 %v107
    %v368 = vunpack.c.l.b16 %v108
    %v369 = vunpack.c.l.b16 %v109
    %v370 = vunpack.c.l.b16 %v110
    %v371 = vunpack.c.l.b16 %v111
    %v372 = vunpack.c.l.b16 %v112
    %v373 = vunpack.c.l.b16 %v113
    %v374 = vunpack.c.l.b16 %v114
    %v375 = vunpack.c.l.b16 %v115
    %v376 = vunpack.c.l.b16 %v116
    %v377 = vunpack.c.l.b16 %v117
    %v378 = vunpack.c.l.b16 %v118
    %v379 = vunpack.c.l.b16 %v119
    %v380 = vunpack.c.l.b16 %v120
    %v381 = vunpack.c.l.b16 %v121
    %v382 = vunpack.c.l.b16 %v122
    %v383 = vunpack.c.l.b16 %v123
    %v384 = vunpack.c.l.b16 %v124
    %v385 = vunpack.c.l.b16 %v125
    %v386 = vunpack.c.l.b16 %v126
    %v387 = vunpack.c.l.b16 %v127
    %v388 = vunpack.c.l.b16 %v128
    %v389 = vunpack.c.l.b16 %v129
    %v390 = vunpack.c.l.b16 %v130
    %v391 = vunpack.c.l.b16 %v131
    %v392 = vunpack.c.l.b16 %v132
    %v393 = vunpack.c.l.b16 %v133
    %v394 = vunpack.c.l.b16 %v134
    %v395 = vunpack.c.l.b16 %v135
    %v396 = vunpack.c.l.b16 %v136
    %v397 = vunpack.c.l.b16 %v137
    %v398 = vunpack.c.l.b16 %v138
    %v399 = vunpack.c.l.b16 %v139
    %v400 = vunpack.c.l.b16 %v140
    %v401 = vunpack.c.l.b16 %v141
    %v402 = vunpack.c.l.b16 %v142
    %v403 = vunpack.c.l.b16 %v143
    %v404 = vunpack.c.l.b16 %v144
    %v405 = vunpack.c.l.b16 %v145
    %v406 = vunpack.c.l.b16 %v146
    %v407 = vunpack.c.l.b16 %v147
    %v408 = vunpack.c.l.b16 %v148
    %v409 = vunpack.c.l.b16 %v149
    %v410 = vunpack.c.l.b16 %v150
    %v411 = vunpack.c.l.b16 %v151
    %v412 = vunpack.c.l.b16 %v152
    %v413 = vunpack.c.l.b16 %v153
    %v414 = vunpack.c.l.b16 %v154
    %v415 = vunpack.c.l.b16 %v155
    %v416 = vunpack.c.l.b16 %v156
    %v417 = vunpack.c.l.b16 %v157
    %v418 = vunpack.c.l.b16 %v158
    %v419 = vunpack.c.l.b16 %v159
    %v420 = vunpack.c.l.b16 %v160
    %v421 = vunpack.c.l.b16 %v161
    %v422 = vunpack.c.l.b16 %v162
    %v423 = vunpack.c.l.b16 %v163
    %v424 = vunpack.c.l.b16 %v164
    %v425 = vunpack.c.l.b16 %v165
    %v426 = vunpack.c.l.b16 %v166
    %v427 = vunpack.c.l.b16 %v167
    %v428 = vunpack.c.l.b16 %v168
    %v429 = vunpack.c.l.b16 %v169
    %v430 = vunpack.c.l.b16 %v170
    %v431 = vunpack.c.l.b16 %v171
    %v432 = vunpack.c.l.b16 %v172
    %v433 = vunpack.c.l.b16 %v173
    %v434 = vunpack.c.l.b16 %v174
    %v435 = vunpack.c.l.b16 %v175
    %v436 = vunpack.c.l.b16 %v176
    %v437 = vunpack.c.l.b16 %v177
    %v438 = vunpack.c.l.b16 %v178
    %v439 = vunpack.c.l.b16 %v179
    %v440 = vunpack.c.l.b16 %v180
    %v441 = vunpack.c.l.b16 %v181
    %v442 = vunpack.c.l.b16 %v182
    %v443 = vunpack.c.l.b16 %v183
    %v444 = vpack.c.b16 %v317, %v316
    %v445 = vpack.c.b16 %v319, %v318
    %v446 = vpack.c.b16 %v321, %v320
    %v447 = vpack.c.b16 %v323, %v322
    %v448 = vpack.c.b16 %v325, %v324
    %v449 = vpack.c.b16 %v327, %v326
    %v450 = vpack.c.b16 %v329, %v328
    %v451 = vpack.c.b16 %v331, %v330
    %v452 = vpack.c.b16 %v333, %v332
    %v453 = vpack.c.b16 %v335, %v334
    %v454 = vpack.c.b16 %v337, %v336
    %v455 = vpack.c.b16 %v339, %v338
    %v456 = vpack.c.b16 %v341, %v340
    %v457 = vpack.c.b16 %v343, %v342
    %v458 = vpack.c.b16 %v345, %v344
    %v459 = vpack.c.b16 %v347, %v346
    %v460 = vpack.c.b16 %v349, %v348
    %v461 = vpack.c.b16 %v351, %v350
    %v462 = vpack.c.b16 %v353, %v352
    %v463 = vpack.c.b16 %v355, %v354
    %v464 = vpack.c.b16 %v357, %v356
    %v465 = vpack.c.b16 %v359, %v358
    %v466 = vpack.c.b16 %v361, %v360
    %v467 = vpack.c.b16 %v363, %v362
    %v468 = vpack.c.b16 %v365, %v364
    %v469 = vpack.c.b16 %v367, %v366
    %v470 = vpack.c.b16 %v369, %v368
    %v471 = vpack.c.b16 %v371, %v370
    %v472 = vpack.c.b16 %v373, %v372
    %v473 = vpack.c.b16 %v375, %v374
    %v474 = vpack.c.b16 %v377, %v376
    %v475 = vpack.c.b16 %v379, %v378
    %v476 = vpack.c.b16 %v381, %v380
    %v477 = vpack.c.b16 %v383, %v382
    %v478 = vpack.c.b16 %v385, %v384
    %v479 = vpack.c.b16 %v387, %v386
    %v480 = vpack.c.b16 %v389, %v388
    %v481 = vpack.c.b16 %v391, %v390
    %v482 = vpack.c.b16 %v393, %v392
    %v483 = vpack.c.b16 %v395, %v394
    %v484 = vpack.c.b16 %v397, %v396
    %v485 = vpack.c.b16 %v399, %v398
    %v486 = vpack.c.b16 %v401, %v400
    %v487 = vpack.c.b16 %v403, %v402
    %v488 = vpack.c.b16 %v405, %v404
    %v489 = vpack.c.b16 %v407, %v406
    %v490 = vpack.c.b16 %v409, %v408
    %v491 = vpack.c.b16 %v411, %v410
    %v492 = vpack.c.b16 %v413, %v412
    %v493 = vpack.c.b16 %v415, %v414
    %v494 = vpack.c.b16 %v417, %v416
    %v495 = vpack.c.b16 %v419, %v418
    %v496 = vpack.c.b16 %v421, %v420
    %v497 = vpack.c.b16 %v423, %v422
    %v498 = vpack.c.b16 %v425, %v424
    %v499 = vpack.c.b16 %v427, %v426
    %v500 = vpack.c.b16 %v429, %v428
    %v501 = vpack.c.b16 %v431, %v430
    %v502 = vpack.c.b16 %v433, %v432
    %v503 = vpack.c.b16 %v435, %v434
    %v504 = vpack.c.b16 %v437, %v436
    %v505 = vpack.c.b16 %v439, %v438
    %v506 = vpack.c.b16 %v441, %v440
    %v507 = vpack.c.b16 %v443, %v442
    %572 = vmatpush.bf16.msra.mxu0 %v451
    %573 = vmatpush.bf16.msra.mxu0 %v450
    %574 = vmatpush.bf16.msra.mxu0 %v449
    %575 = vmatpush.bf16.msra.mxu0 %v448
    %576 = vmatpush.bf16.msra.mxu0 %v447
    %577 = vmatpush.bf16.msra.mxu0 %v446
    %578 = vmatpush.bf16.msra.mxu0 %v445
    %579 = vmatpush.bf16.msra.mxu0 %v444
    %580 = vmatmul.bf16.gmra.mxu0 %v48
    %v581 = vpop.f32.mrf.mxu0
    %v582 = vadd.f32 %v186, %v581
    %v583 = vpop.f32.mrf.mxu0
    %584 = vdwg.mxu0
    %585 = vmatpush.bf16.msra.mxu0 %v459
    %586 = vmatpush.bf16.msra.mxu0 %v458
    %587 = vmatpush.bf16.msra.mxu0 %v457
    %588 = vmatpush.bf16.msra.mxu0 %v456
    %589 = vmatpush.bf16.msra.mxu0 %v455
    %590 = vmatpush.bf16.msra.mxu0 %v454
    %591 = vmatpush.bf16.msra.mxu0 %v453
    %592 = vmatpush.bf16.msra.mxu0 %v452
    %593 = vmatmul.bf16.gmra.mxu0 %v49
    %v594 = vpop.f32.mrf.mxu0
    %v595 = vadd.f32 %v582, %v594
    %v596 = vpop.f32.mrf.mxu0
    %597 = vdwg.mxu0
    %598 = vmatpush.bf16.msra.mxu0 %v467
    %599 = vmatpush.bf16.msra.mxu0 %v466
    %600 = vmatpush.bf16.msra.mxu0 %v465
    %601 = vmatpush.bf16.msra.mxu0 %v464
    %602 = vmatpush.bf16.msra.mxu0 %v463
    %603 = vmatpush.bf16.msra.mxu0 %v462
    %604 = vmatpush.bf16.msra.mxu0 %v461
    %605 = vmatpush.bf16.msra.mxu0 %v460
    %606 = vmatmul.bf16.gmra.mxu0 %v50
    %v607 = vpop.f32.mrf.mxu0
    %v608 = vadd.f32 %v595, %v607
    %v609 = vpop.f32.mrf.mxu0
    %610 = vdwg.mxu0
    %611 = vmatpush.bf16.msra.mxu0 %v475
    %612 = vmatpush.bf16.msra.mxu0 %v474
    %613 = vmatpush.bf16.msra.mxu0 %v473
    %614 = vmatpush.bf16.msra.mxu0 %v472
    %615 = vmatpush.bf16.msra.mxu0 %v471
    %616 = vmatpush.bf16.msra.mxu0 %v470
    %617 = vmatpush.bf16.msra.mxu0 %v469
    %618 = vmatpush.bf16.msra.mxu0 %v468
    %619 = vmatmul.bf16.gmra.mxu0 %v51
    %v620 = vpop.f32.mrf.mxu0
    %v621 = vadd.f32 %v608, %v620
    %v622 = vpop.f32.mrf.mxu0
    %623 = vdwg.mxu0
    %624 = vmatpush.bf16.msra.mxu0 %v483
    %625 = vmatpush.bf16.msra.mxu0 %v482
    %626 = vmatpush.bf16.msra.mxu0 %v481
    %627 = vmatpush.bf16.msra.mxu0 %v480
    %628 = vmatpush.bf16.msra.mxu0 %v479
    %629 = vmatpush.bf16.msra.mxu0 %v478
    %630 = vmatpush.bf16.msra.mxu0 %v477
    %631 = vmatpush.bf16.msra.mxu0 %v476
    %632 = vmatmul.bf16.gmra.mxu0 %v52
    %v633 = vpop.f32.mrf.mxu0
    %v634 = vadd.f32 %v621, %v633
    %v635 = vpop.f32.mrf.mxu0
    %636 = vdwg.mxu0
    %637 = vmatpush.bf16.msra.mxu0 %v491
    %638 = vmatpush.bf16.msra.mxu0 %v490
    %639 = vmatpush.bf16.msra.mxu0 %v489
    %640 = vmatpush.bf16.msra.mxu0 %v488
    %641 = vmatpush.bf16.msra.mxu0 %v487
    %642 = vmatpush.bf16.msra.mxu0 %v486
    %643 = vmatpush.bf16.msra.mxu0 %v485
    %644 = vmatpush.bf16.msra.mxu0 %v484
    %645 = vmatmul.bf16.gmra.mxu0 %v53
    %v646 = vpop.f32.mrf.mxu0
    %v647 = vadd.f32 %v634, %v646
    %v648 = vpop.f32.mrf.mxu0
    %649 = vdwg.mxu0
    %650 = vmatpush.bf16.msra.mxu0 %v499
    %651 = vmatpush.bf16.msra.mxu0 %v498
    %652 = vmatpush.bf16.msra.mxu0 %v497
    %653 = vmatpush.bf16.msra.mxu0 %v496
    %654 = vmatpush.bf16.msra.mxu0 %v495
    %655 = vmatpush.bf16.msra.mxu0 %v494
    %656 = vmatpush.bf16.msra.mxu0 %v493
    %657 = vmatpush.bf16.msra.mxu0 %v492
    %658 = vmatmul.bf16.gmra.mxu0 %v54
    %v659 = vpop.f32.mrf.mxu0
    %v660 = vadd.f32 %v647, %v659
    %v661 = vpop.f32.mrf.mxu0
    %662 = vdwg.mxu0
    %663 = vmatpush.bf16.msra.mxu0 %v507
    %664 = vmatpush.bf16.msra.mxu0 %v506
    %665 = vmatpush.bf16.msra.mxu0 %v505
    %666 = vmatpush.bf16.msra.mxu0 %v504
    %667 = vmatpush.bf16.msra.mxu0 %v503
    %668 = vmatpush.bf16.msra.mxu0 %v502
    %669 = vmatpush.bf16.msra.mxu0 %v501
    %670 = vmatpush.bf16.msra.mxu0 %v500
    %671 = vmatmul.bf16.gmra.mxu0 %v55
    %v672 = vpop.f32.mrf.mxu0
    %v673 = vadd.f32 %v660, %v672
    %v674 = vpop.f32.mrf.mxu0
    %675 = vdwg.mxu0
    %v676 = vmax.f32 %v673, 0.0
    %v677 = vpack.c.bf16 %v676, %v676
    %v678 = vld [vmem:[%s3] sm:$0xff]
    %v679 = vld [vmem:[%s3 + $0x8] sm:$0xff]
    %v680 = vld [vmem:[%s3 + $0x10] sm:$0xff]
    %v681 = vld [vmem:[%s3 + $0x18] sm:$0xff]
    %v682 = vld [vmem:[%s4] sm:$0x3]
    %v684 = vperm.slane %v682, 0
    %v685 = vperm.slane %v682, 1
    %v692 = vunpack.c.l.b16 %v678
    %v693 = vunpack.c.h.b16 %v678
    %v694 = vunpack.c.l.b16 %v679
    %v695 = vunpack.c.h.b16 %v679
    %v696 = vunpack.c.l.b16 %v680
    %v697 = vunpack.c.h.b16 %v680
    %v698 = vunpack.c.l.b16 %v681
    %v699 = vunpack.c.h.b16 %v681
    %v700 = vpack.c.b16 %v694, %v692
    %v701 = vpack.c.b16 %v695, %v693
    %v702 = vpack.c.b16 %v698, %v696
    %v703 = vpack.c.b16 %v699, %v697
    %vm708 = vcmask 261120
    %v710 = vsel %vm708, %v677, 0
    %712 = vmatpush.bf16.msra.mxu0 0
    %713 = vmatpush.bf16.msra.mxu0 0
    %714 = vmatpush.bf16.msra.mxu0 0
    %715 = vmatpush.bf16.msra.mxu0 0
    %716 = vmatpush.bf16.msra.mxu0 0
    %717 = vmatpush.bf16.msra.mxu0 0
    %718 = vmatpush.bf16.msra.mxu0 %v702
    %719 = vmatpush.bf16.msra.mxu0 %v700
    %720 = vmatmul.bf16.gmra.mxu0 %v710
    %v721 = vpop.f32.mrf.mxu0
    %v722 = vadd.f32 %v684, %v721
    %v723 = vpop.f32.mrf.mxu0
    %724 = vdwg.mxu0
    %725 = vmatpush.bf16.msra.mxu0 0
    %726 = vmatpush.bf16.msra.mxu0 0
    %727 = vmatpush.bf16.msra.mxu0 0
    %728 = vmatpush.bf16.msra.mxu0 0
    %729 = vmatpush.bf16.msra.mxu0 0
    %730 = vmatpush.bf16.msra.mxu0 0
    %731 = vmatpush.bf16.msra.mxu0 %v703
    %732 = vmatpush.bf16.msra.mxu0 %v701
    %733 = vmatmul.bf16.gmra.mxu0 %v710
    %v734 = vpop.f32.mrf.mxu0
    %v735 = vadd.f32 %v685, %v734
    %v736 = vpop.f32.mrf.mxu0
    %737 = vdwg.mxu0
    %v738 = vmul.f32 %v735, 0.5
    %v739 = vmul.f32 %v738, 1.442695
    %v740 = vpow.pop %v739
    %v741 = vld [vmem:[%s5] sm:$0x3]
    %v742 = vmul.f32 %v740, %v741
    %v743 = vadd.f32 %v722, %v742
    %744 = vst [vmem:[#allocation2] sm:$0x3] %v743
    // Predicated region
    $region26: #{tpu_custom_call.1} parent=1 // pred_check
      _
    $region27: #{tpu_custom_call.1} parent=1 // pred_check_branch
      %746 = sbr.rel (0) target = $region29
    $region28: #{tpu_custom_call.1} parent=1 // pred_region
      %748 = vsyncadd [#allocation3], 0
      %s750 = sshll.u32 [#allocation2], 4
      %s751 = int_to_ptr.vmem [resolvable:$true] %s750
      %s752 = sshll.u32 %s6, 4
      %s753 = int_to_ptr.hbm [resolvable:$true] %s752
      %755 = dma.vmem_to_hbm [thread:$0]  %s751, 32, %s753, [#allocation3]
    $region29: #{tpu_custom_call.1} parent=1 // pred_fallthru
      _
    // Predicated region
    $region30: #{tpu_custom_call.1} parent=1 // pred_check
      _
    $region31: #{tpu_custom_call.1} parent=1 // pred_check_branch
      %757 = sbr.rel (0) target = $region33
    $region32: #{tpu_custom_call.1} parent=1 // pred_region
      %759 = dma.done [#allocation3], 32
    $region33: #{tpu_custom_call.1} parent=1 // pred_fallthru
      _
    %760 = vsyncpa [#allocation3], 1

// kernel: tpu_custom_call.1
$region0: #{tpu_custom_call.1}
  #allocation0 [shape = 'u32[]', space=smem, size = 0x4, offset = 0x4, fixed_abs, tag = 'smem constant byte address 0x4 - core index']
  #allocation1 [shape = 'u32[72,128]{1,0:T(1,128)}', space=vmem, size = 0x9000, scoped, tag = 'internal scratch']
  %s0 = inlined_call_operand.vmem [shape: f32[2,1024], index: 0, kind: input, shape index: {}]
  %s1 = inlined_call_operand.vmem [shape: bf16[1024,32], index: 1, kind: input, shape index: {}]
  %s2 = inlined_call_operand.vmem [shape: f32[1,32], index: 2, kind: input, shape index: {}]
  %s3 = inlined_call_operand.vmem [shape: bf16[32,256], index: 3, kind: input, shape index: {}]
  %s4 = inlined_call_operand.vmem [shape: f32[1,256], index: 4, kind: input, shape index: {}]
  %s5 = inlined_call_operand.vmem [shape: f32[2,128], index: 5, kind: input, shape index: {}]
  %s6 = inlined_call_operand.hbm [shape: f32[2,128], index: 6, kind: output, shape index: {}]
  %s7 = sld [smem:[#allocation0]]
  $region34: #{tpu_custom_call.1} parent=0
    _
  %s9 = ssub.s32 1, %s7
  %s10 = scalar_select 0, %s9, %s7
  $region1: #{tpu_custom_call.1} parent=0
    #allocation2 [shape = 'u8[1024]{0}', space=vmem, size = 0x400, scoped, tag = 'output window, operand 0, single buffered']
    #allocation3 [shape = 's32[1]{0}', space=sflag, size = 0x4, scoped, tag = 'scoped memory for tpu_custom_call.1']
    %11 = vsyncpa [#allocation3], 0
    // Predicated region
    $region2: #{tpu_custom_call.1} parent=1 // pred_check
      _
    $region3: #{tpu_custom_call.1} parent=1 // pred_check_branch
      %13 = sbr.rel (0) target = $region5
    $region4: #{tpu_custom_call.1} parent=1 // pred_region
      _
    $region5: #{tpu_custom_call.1} parent=1 // pred_fallthru
      _
    // Predicated region
    $region6: #{tpu_custom_call.1} parent=1 // pred_check
      _
    $region7: #{tpu_custom_call.1} parent=1 // pred_check_branch
      %15 = sbr.rel (0) target = $region9
    $region8: #{tpu_custom_call.1} parent=1 // pred_region
      _
    $region9: #{tpu_custom_call.1} parent=1 // pred_fallthru
      _
    // Predicated region
    $region10: #{tpu_custom_call.1} parent=1 // pred_check
      _
    $region11: #{tpu_custom_call.1} parent=1 // pred_check_branch
      %17 = sbr.rel (0) target = $region13
    $region12: #{tpu_custom_call.1} parent=1 // pred_region
      _
    $region13: #{tpu_custom_call.1} parent=1 // pred_fallthru
      _
    // Predicated region
    $region14: #{tpu_custom_call.1} parent=1 // pred_check
      _
    $region15: #{tpu_custom_call.1} parent=1 // pred_check_branch
      %19 = sbr.rel (0) target = $region17
    $region16: #{tpu_custom_call.1} parent=1 // pred_region
      _
    $region17: #{tpu_custom_call.1} parent=1 // pred_fallthru
      _
    // Predicated region
    $region18: #{tpu_custom_call.1} parent=1 // pred_check
      _
    $region19: #{tpu_custom_call.1} parent=1 // pred_check_branch
      %21 = sbr.rel (0) target = $region21
    $region20: #{tpu_custom_call.1} parent=1 // pred_region
      _
    $region21: #{tpu_custom_call.1} parent=1 // pred_fallthru
      _
    // Predicated region
    $region22: #{tpu_custom_call.1} parent=1 // pred_check
      _
    $region23: #{tpu_custom_call.1} parent=1 // pred_check_branch
      %23 = sbr.rel (0) target = $region25
    $region24: #{tpu_custom_call.1} parent=1 // pred_region
      _
    $region25: #{tpu_custom_call.1} parent=1 // pred_fallthru
      _
    %v25 = vld [vmem:[%s0] sm:$0xff]
    %v26 = vld [vmem:[%s0 + $0x8] sm:$0xff]
    %29 = vst [vmem:[#allocation1] ss:$4 sm:$0xff] %v25
    %s30 = scalar_lea.vmem [#allocation1], 32
    %31 = vst [vmem:[%s30] ss:$4 sm:$0xff] %v26
    %v32 = vld.sshfl [vmem:[#allocation1] sm:$0xff pattern:$0x73625140]
    %v33 = vld.sshfl [vmem:[#allocation1 + $0x8] sm:$0xff pattern:$0x73625140]
    %v34 = vld.sshfl [vmem:[#allocation1 + $0x10] sm:$0xff pattern:$0x73625140]
    %v35 = vld.sshfl [vmem:[#allocation1 + $0x18] sm:$0xff pattern:$0x73625140]
    %v36 = vld.sshfl [vmem:[#allocation1 + $0x20] sm:$0xff pattern:$0x73625140]
    %v37 = vld.sshfl [vmem:[#allocation1 + $0x28] sm:$0xff pattern:$0x73625140]
    %v38 = vld.sshfl [vmem:[#allocation1 + $0x30] sm:$0xff pattern:$0x73625140]
    %v39 = vld.sshfl [vmem:[#allocation1 + $0x38] sm:$0xff pattern:$0x73625140]
    %v48 = vpack.c.bf16 %v32, %v32
    %v49 = vpack.c.bf16 %v33, %v33
    %v50 = vpack.c.bf16 %v34, %v34
    %v51 = vpack.c.bf16 %v35, %v35
    %v52 = vpack.c.bf16 %v36, %v36
    %v53 = vpack.c.bf16 %v37, %v37
    %v54 = vpack.c.bf16 %v38, %v38
    %v55 = vpack.c.bf16 %v39, %v39
    %v56 = vld [vmem:[%s1] sm:$0xf]
    %v57 = vld [vmem:[%s1 + $0x4] sm:$0xf]
    %v58 = vld [vmem:[%s1 + $0x8] sm:$0xf]
    %v59 = vld [vmem:[%s1 + $0xc] sm:$0xf]
    %v60 = vld [vmem:[%s1 + $0x10] sm:$0xf]
    %v61 = vld [vmem:[%s1 + $0x14] sm:$0xf]
    %v62 = vld [vmem:[%s1 + $0x18] sm:$0xf]
    %v63 = vld [vmem:[%s1 + $0x1c] sm:$0xf]
    %v64 = vld [vmem:[%s1 + $0x20] sm:$0xf]
    %v65 = vld [vmem:[%s1 + $0x24] sm:$0xf]
    %v66 = vld [vmem:[%s1 + $0x28] sm:$0xf]
    %v67 = vld [vmem:[%s1 + $0x2c] sm:$0xf]
    %v68 = vld [vmem:[%s1 + $0x30] sm:$0xf]
    %v69 = vld [vmem:[%s1 + $0x34] sm:$0xf]
    %v70 = vld [vmem:[%s1 + $0x38] sm:$0xf]
    %v71 = vld [vmem:[%s1 + $0x3c] sm:$0xf]
    %v72 = vld [vmem:[%s1 + $0x40] sm:$0xf]
    %v73 = vld [vmem:[%s1 + $0x44] sm:$0xf]
    %v74 = vld [vmem:[%s1 + $0x48] sm:$0xf]
    %v75 = vld [vmem:[%s1 + $0x4c] sm:$0xf]
    %v76 = vld [vmem:[%s1 + $0x50] sm:$0xf]
    %v77 = vld [vmem:[%s1 + $0x54] sm:$0xf]
    %v78 = vld [vmem:[%s1 + $0x58] sm:$0xf]
    %v79 = vld [vmem:[%s1 + $0x5c] sm:$0xf]
    %v80 = vld [vmem:[%s1 + $0x60] sm:$0xf]
    %v81 = vld [vmem:[%s1 + $0x64] sm:$0xf]
    %v82 = vld [vmem:[%s1 + $0x68] sm:$0xf]
    %v83 = vld [vmem:[%s1 + $0x6c] sm:$0xf]
    %v84 = vld [vmem:[%s1 + $0x70] sm:$0xf]
    %v85 = vld [vmem:[%s1 + $0x74] sm:$0xf]
    %v86 = vld [vmem:[%s1 + $0x78] sm:$0xf]
    %v87 = vld [vmem:[%s1 + $0x7c] sm:$0xf]
    %v88 = vld [vmem:[%s1 + $0x80] sm:$0xf]
    %v89 = vld [vmem:[%s1 + $0x84] sm:$0xf]
    %v90 = vld [vmem:[%s1 + $0x88] sm:$0xf]
    %v91 = vld [vmem:[%s1 + $0x8c] sm:$0xf]
    %v92 = vld [vmem:[%s1 + $0x90] sm:$0xf]
    %v93 = vld [vmem:[%s1 + $0x94] sm:$0xf]
    %v94 = vld [vmem:[%s1 + $0x98] sm:$0xf]
    %v95 = vld [vmem:[%s1 + $0x9c] sm:$0xf]
    %v96 = vld [vmem:[%s1 + $0xa0] sm:$0xf]
    %v97 = vld [vmem:[%s1 + $0xa4] sm:$0xf]
    %v98 = vld [vmem:[%s1 + $0xa8] sm:$0xf]
    %v99 = vld [vmem:[%s1 + $0xac] sm:$0xf]
    %v100 = vld [vmem:[%s1 + $0xb0] sm:$0xf]
    %v101 = vld [vmem:[%s1 + $0xb4] sm:$0xf]
    %v102 = vld [vmem:[%s1 + $0xb8] sm:$0xf]
    %v103 = vld [vmem:[%s1 + $0xbc] sm:$0xf]
    %v104 = vld [vmem:[%s1 + $0xc0] sm:$0xf]
    %v105 = vld [vmem:[%s1 + $0xc4] sm:$0xf]
    %v106 = vld [vmem:[%s1 + $0xc8] sm:$0xf]
    %v107 = vld [vmem:[%s1 + $0xcc] sm:$0xf]
    %v108 = vld [vmem:[%s1 + $0xd0] sm:$0xf]
    %v109 = vld [vmem:[%s1 + $0xd4] sm:$0xf]
    %v110 = vld [vmem:[%s1 + $0xd8] sm:$0xf]
    %v111 = vld [vmem:[%s1 + $0xdc] sm:$0xf]
    %v112 = vld [vmem:[%s1 + $0xe0] sm:$0xf]
    %v113 = vld [vmem:[%s1 + $0xe4] sm:$0xf]
    %v114 = vld [vmem:[%s1 + $0xe8] sm:$0xf]
    %v115 = vld [vmem:[%s1 + $0xec] sm:$0xf]
    %v116 = vld [vmem:[%s1 + $0xf0] sm:$0xf]
    %v117 = vld [vmem:[%s1 + $0xf4] sm:$0xf]
    %v118 = vld [vmem:[%s1 + $0xf8] sm:$0xf]
    %v119 = vld [vmem:[%s1 + $0xfc] sm:$0xf]
    %v120 = vld [vmem:[%s1 + $0x100] sm:$0xf]
    %v121 = vld [vmem:[%s1 + $0x104] sm:$0xf]
    %v122 = vld [vmem:[%s1 + $0x108] sm:$0xf]
    %v123 = vld [vmem:[%s1 + $0x10c] sm:$0xf]
    %v124 = vld [vmem:[%s1 + $0x110] sm:$0xf]
    %v125 = vld [vmem:[%s1 + $0x114] sm:$0xf]
    %v126 = vld [vmem:[%s1 + $0x118] sm:$0xf]
    %v127 = vld [vmem:[%s1 + $0x11c] sm:$0xf]
    %v128 = vld [vmem:[%s1 + $0x120] sm:$0xf]
    %v129 = vld [vmem:[%s1 + $0x124] sm:$0xf]
    %v130 = vld [vmem:[%s1 + $0x128] sm:$0xf]
    %v131 = vld [vmem:[%s1 + $0x12c] sm:$0xf]
    %v132 = vld [vmem:[%s1 + $0x130] sm:$0xf]
    %v133 = vld [vmem:[%s1 + $0x134] sm:$0xf]
    %v134 = vld [vmem:[%s1 + $0x138] sm:$0xf]
    %v135 = vld [vmem:[%s1 + $0x13c] sm:$0xf]
    %v136 = vld [vmem:[%s1 + $0x140] sm:$0xf]
    %v137 = vld [vmem:[%s1 + $0x144] sm:$0xf]
    %v138 = vld [vmem:[%s1 + $0x148] sm:$0xf]
    %v139 = vld [vmem:[%s1 + $0x14c] sm:$0xf]
    %v140 = vld [vmem:[%s1 + $0x150] sm:$0xf]
    %v141 = vld [vmem:[%s1 + $0x154] sm:$0xf]
    %v142 = vld [vmem:[%s1 + $0x158] sm:$0xf]
    %v143 = vld [vmem:[%s1 + $0x15c] sm:$0xf]
    %v144 = vld [vmem:[%s1 + $0x160] sm:$0xf]
    %v145 = vld [vmem:[%s1 + $0x164] sm:$0xf]
    %v146 = vld [vmem:[%s1 + $0x168] sm:$0xf]
    %v147 = vld [vmem:[%s1 + $0x16c] sm:$0xf]
    %v148 = vld [vmem:[%s1 + $0x170] sm:$0xf]
    %v149 = vld [vmem:[%s1 + $0x174] sm:$0xf]
    %v150 = vld [vmem:[%s1 + $0x178] sm:$0xf]
    %v151 = vld [vmem:[%s1 + $0x17c] sm:$0xf]
    %v152 = vld [vmem:[%s1 + $0x180] sm:$0xf]
    %v153 = vld [vmem:[%s1 + $0x184] sm:$0xf]
    %v154 = vld [vmem:[%s1 + $0x188] sm:$0xf]
    %v155 = vld [vmem:[%s1 + $0x18c] sm:$0xf]
    %v156 = vld [vmem:[%s1 + $0x190] sm:$0xf]
    %v157 = vld [vmem:[%s1 + $0x194] sm:$0xf]
    %v158 = vld [vmem:[%s1 + $0x198] sm:$0xf]
    %v159 = vld [vmem:[%s1 + $0x19c] sm:$0xf]
    %v160 = vld [vmem:[%s1 + $0x1a0] sm:$0xf]
    %v161 = vld [vmem:[%s1 + $0x1a4] sm:$0xf]
    %v162 = vld [vmem:[%s1 + $0x1a8] sm:$0xf]
    %v163 = vld [vmem:[%s1 + $0x1ac] sm:$0xf]
    %v164 = vld [vmem:[%s1 + $0x1b0] sm:$0xf]
    %v165 = vld [vmem:[%s1 + $0x1b4] sm:$0xf]
    %v166 = vld [vmem:[%s1 + $0x1b8] sm:$0xf]
    %v167 = vld [vmem:[%s1 + $0x1bc] sm:$0xf]
    %v168 = vld [vmem:[%s1 + $0x1c0] sm:$0xf]
    %v169 = vld [vmem:[%s1 + $0x1c4] sm:$0xf]
    %v170 = vld [vmem:[%s1 + $0x1c8] sm:$0xf]
    %v171 = vld [vmem:[%s1 + $0x1cc] sm:$0xf]
    %v172 = vld [vmem:[%s1 + $0x1d0] sm:$0xf]
    %v173 = vld [vmem:[%s1 + $0x1d4] sm:$0xf]
    %v174 = vld [vmem:[%s1 + $0x1d8] sm:$0xf]
    %v175 = vld [vmem:[%s1 + $0x1dc] sm:$0xf]
    %v176 = vld [vmem:[%s1 + $0x1e0] sm:$0xf]
    %v177 = vld [vmem:[%s1 + $0x1e4] sm:$0xf]
    %v178 = vld [vmem:[%s1 + $0x1e8] sm:$0xf]
    %v179 = vld [vmem:[%s1 + $0x1ec] sm:$0xf]
    %v180 = vld [vmem:[%s1 + $0x1f0] sm:$0xf]
    %v181 = vld [vmem:[%s1 + $0x1f4] sm:$0xf]
    %v182 = vld [vmem:[%s1 + $0x1f8] sm:$0xf]
    %v183 = vld [vmem:[%s1 + $0x1fc] sm:$0xf]
    %v184 = vld [vmem:[%s2] sm:$0x1]
    %v186 = vperm.slane %v184, 0
    %v316 = vunpack.c.l.b16 %v56
    %v317 = vunpack.c.l.b16 %v57
    %v318 = vunpack.c.l.b16 %v58
    %v319 = vunpack.c.l.b16 %v59
    %v320 = vunpack.c.l.b16 %v60
    %v321 = vunpack.c.l.b16 %v61
    %v322 = vunpack.c.l.b16 %v62
    %v323 = vunpack.c.l.b16 %v63
    %v324 = vunpack.c.l.b16 %v64
    %v325 = vunpack.c.l.b16 %v65
    %v326 = vunpack.c.l.b16 %v66
    %v327 = vunpack.c.l.b16 %v67
    %v328 = vunpack.c.l.b16 %v68
    %v329 = vunpack.c.l.b16 %v69
    %v330 = vunpack.c.l.b16 %v70
    %v331 = vunpack.c.l.b16 %v71
    %v332 = vunpack.c.l.b16 %v72
    %v333 = vunpack.c.l.b16 %v73
    %v334 = vunpack.c.l.b16 %v74
    %v335 = vunpack.c.l.b16 %v75
    %v336 = vunpack.c.l.b16 %v76
    %v337 = vunpack.c.l.b16 %v77
    %v338 = vunpack.c.l.b16 %v78
    %v339 = vunpack.c.l.b16 %v79
    %v340 = vunpack.c.l.b16 %v80
    %v341 = vunpack.c.l.b16 %v81
    %v342 = vunpack.c.l.b16 %v82
    %v343 = vunpack.c.l.b16 %v83
    %v344 = vunpack.c.l.b16 %v84
    %v345 = vunpack.c.l.b16 %v85
    %v346 = vunpack.c.l.b16 %v86
    %v347 = vunpack.c.l.b16 %v87
    %v348 = vunpack.c.l.b16 %v88
    %v349 = vunpack.c.l.b16 %v89
    %v350 = vunpack.c.l.b16 %v90
    %v351 = vunpack.c.l.b16 %v91
    %v352 = vunpack.c.l.b16 %v92
    %v353 = vunpack.c.l.b16 %v93
    %v354 = vunpack.c.l.b16 %v94
    %v355 = vunpack.c.l.b16 %v95
    %v356 = vunpack.c.l.b16 %v96
    %v357 = vunpack.c.l.b16 %v97
    %v358 = vunpack.c.l.b16 %v98
    %v359 = vunpack.c.l.b16 %v99
    %v360 = vunpack.c.l.b16 %v100
    %v361 = vunpack.c.l.b16 %v101
    %v362 = vunpack.c.l.b16 %v102
    %v363 = vunpack.c.l.b16 %v103
    %v364 = vunpack.c.l.b16 %v104
    %v365 = vunpack.c.l.b16 %v105
    %v366 = vunpack.c.l.b16 %v106
    %v367 = vunpack.c.l.b16 %v107
    %v368 = vunpack.c.l.b16 %v108
    %v369 = vunpack.c.l.b16 %v109
    %v370 = vunpack.c.l.b16 %v110
    %v371 = vunpack.c.l.b16 %v111
    %v372 = vunpack.c.l.b16 %v112
    %v373 = vunpack.c.l.b16 %v113
    %v374 = vunpack.c.l.b16 %v114
    %v375 = vunpack.c.l.b16 %v115
    %v376 = vunpack.c.l.b16 %v116
    %v377 = vunpack.c.l.b16 %v117
    %v378 = vunpack.c.l.b16 %v118
    %v379 = vunpack.c.l.b16 %v119
    %v380 = vunpack.c.l.b16 %v120
    %v381 = vunpack.c.l.b16 %v121
    %v382 = vunpack.c.l.b16 %v122
    %v383 = vunpack.c.l.b16 %v123
    %v384 = vunpack.c.l.b16 %v124
    %v385 = vunpack.c.l.b16 %v125
    %v386 = vunpack.c.l.b16 %v126
    %v387 = vunpack.c.l.b16 %v127
    %v388 = vunpack.c.l.b16 %v128
    %v389 = vunpack.c.l.b16 %v129
    %v390 = vunpack.c.l.b16 %v130
    %v391 = vunpack.c.l.b16 %v131
    %v392 = vunpack.c.l.b16 %v132
    %v393 = vunpack.c.l.b16 %v133
    %v394 = vunpack.c.l.b16 %v134
    %v395 = vunpack.c.l.b16 %v135
    %v396 = vunpack.c.l.b16 %v136
    %v397 = vunpack.c.l.b16 %v137
    %v398 = vunpack.c.l.b16 %v138
    %v399 = vunpack.c.l.b16 %v139
    %v400 = vunpack.c.l.b16 %v140
    %v401 = vunpack.c.l.b16 %v141
    %v402 = vunpack.c.l.b16 %v142
    %v403 = vunpack.c.l.b16 %v143
    %v404 = vunpack.c.l.b16 %v144
    %v405 = vunpack.c.l.b16 %v145
    %v406 = vunpack.c.l.b16 %v146
    %v407 = vunpack.c.l.b16 %v147
    %v408 = vunpack.c.l.b16 %v148
    %v409 = vunpack.c.l.b16 %v149
    %v410 = vunpack.c.l.b16 %v150
    %v411 = vunpack.c.l.b16 %v151
    %v412 = vunpack.c.l.b16 %v152
    %v413 = vunpack.c.l.b16 %v153
    %v414 = vunpack.c.l.b16 %v154
    %v415 = vunpack.c.l.b16 %v155
    %v416 = vunpack.c.l.b16 %v156
    %v417 = vunpack.c.l.b16 %v157
    %v418 = vunpack.c.l.b16 %v158
    %v419 = vunpack.c.l.b16 %v159
    %v420 = vunpack.c.l.b16 %v160
    %v421 = vunpack.c.l.b16 %v161
    %v422 = vunpack.c.l.b16 %v162
    %v423 = vunpack.c.l.b16 %v163
    %v424 = vunpack.c.l.b16 %v164
    %v425 = vunpack.c.l.b16 %v165
    %v426 = vunpack.c.l.b16 %v166
    %v427 = vunpack.c.l.b16 %v167
    %v428 = vunpack.c.l.b16 %v168
    %v429 = vunpack.c.l.b16 %v169
    %v430 = vunpack.c.l.b16 %v170
    %v431 = vunpack.c.l.b16 %v171
    %v432 = vunpack.c.l.b16 %v172
    %v433 = vunpack.c.l.b16 %v173
    %v434 = vunpack.c.l.b16 %v174
    %v435 = vunpack.c.l.b16 %v175
    %v436 = vunpack.c.l.b16 %v176
    %v437 = vunpack.c.l.b16 %v177
    %v438 = vunpack.c.l.b16 %v178
    %v439 = vunpack.c.l.b16 %v179
    %v440 = vunpack.c.l.b16 %v180
    %v441 = vunpack.c.l.b16 %v181
    %v442 = vunpack.c.l.b16 %v182
    %v443 = vunpack.c.l.b16 %v183
    %v444 = vpack.c.b16 %v317, %v316
    %v445 = vpack.c.b16 %v319, %v318
    %v446 = vpack.c.b16 %v321, %v320
    %v447 = vpack.c.b16 %v323, %v322
    %v448 = vpack.c.b16 %v325, %v324
    %v449 = vpack.c.b16 %v327, %v326
    %v450 = vpack.c.b16 %v329, %v328
    %v451 = vpack.c.b16 %v331, %v330
    %v452 = vpack.c.b16 %v333, %v332
    %v453 = vpack.c.b16 %v335, %v334
    %v454 = vpack.c.b16 %v337, %v336
    %v455 = vpack.c.b16 %v339, %v338
    %v456 = vpack.c.b16 %v341, %v340
    %v457 = vpack.c.b16 %v343, %v342
    %v458 = vpack.c.b16 %v345, %v344
    %v459 = vpack.c.b16 %v347, %v346
    %v460 = vpack.c.b16 %v349, %v348
    %v461 = vpack.c.b16 %v351, %v350
    %v462 = vpack.c.b16 %v353, %v352
    %v463 = vpack.c.b16 %v355, %v354
    %v464 = vpack.c.b16 %v357, %v356
    %v465 = vpack.c.b16 %v359, %v358
    %v466 = vpack.c.b16 %v361, %v360
    %v467 = vpack.c.b16 %v363, %v362
    %v468 = vpack.c.b16 %v365, %v364
    %v469 = vpack.c.b16 %v367, %v366
    %v470 = vpack.c.b16 %v369, %v368
    %v471 = vpack.c.b16 %v371, %v370
    %v472 = vpack.c.b16 %v373, %v372
    %v473 = vpack.c.b16 %v375, %v374
    %v474 = vpack.c.b16 %v377, %v376
    %v475 = vpack.c.b16 %v379, %v378
    %v476 = vpack.c.b16 %v381, %v380
    %v477 = vpack.c.b16 %v383, %v382
    %v478 = vpack.c.b16 %v385, %v384
    %v479 = vpack.c.b16 %v387, %v386
    %v480 = vpack.c.b16 %v389, %v388
    %v481 = vpack.c.b16 %v391, %v390
    %v482 = vpack.c.b16 %v393, %v392
    %v483 = vpack.c.b16 %v395, %v394
    %v484 = vpack.c.b16 %v397, %v396
    %v485 = vpack.c.b16 %v399, %v398
    %v486 = vpack.c.b16 %v401, %v400
    %v487 = vpack.c.b16 %v403, %v402
    %v488 = vpack.c.b16 %v405, %v404
    %v489 = vpack.c.b16 %v407, %v406
    %v490 = vpack.c.b16 %v409, %v408
    %v491 = vpack.c.b16 %v411, %v410
    %v492 = vpack.c.b16 %v413, %v412
    %v493 = vpack.c.b16 %v415, %v414
    %v494 = vpack.c.b16 %v417, %v416
    %v495 = vpack.c.b16 %v419, %v418
    %v496 = vpack.c.b16 %v421, %v420
    %v497 = vpack.c.b16 %v423, %v422
    %v498 = vpack.c.b16 %v425, %v424
    %v499 = vpack.c.b16 %v427, %v426
    %v500 = vpack.c.b16 %v429, %v428
    %v501 = vpack.c.b16 %v431, %v430
    %v502 = vpack.c.b16 %v433, %v432
    %v503 = vpack.c.b16 %v435, %v434
    %v504 = vpack.c.b16 %v437, %v436
    %v505 = vpack.c.b16 %v439, %v438
    %v506 = vpack.c.b16 %v441, %v440
    %v507 = vpack.c.b16 %v443, %v442
    %572 = vmatpush.bf16.msra.mxu0 %v451
    %573 = vmatpush.bf16.msra.mxu0 %v450
    %574 = vmatpush.bf16.msra.mxu0 %v449
    %575 = vmatpush.bf16.msra.mxu0 %v448
    %576 = vmatpush.bf16.msra.mxu0 %v447
    %577 = vmatpush.bf16.msra.mxu0 %v446
    %578 = vmatpush.bf16.msra.mxu0 %v445
    %579 = vmatpush.bf16.msra.mxu0 %v444
    %580 = vmatmul.bf16.gmra.mxu0 %v48
    %v581 = vpop.f32.mrf.mxu0
    %v582 = vadd.f32 %v186, %v581
    %v583 = vpop.f32.mrf.mxu0
    %584 = vdwg.mxu0
    %585 = vmatpush.bf16.msra.mxu0 %v459
    %586 = vmatpush.bf16.msra.mxu0 %v458
    %587 = vmatpush.bf16.msra.mxu0 %v457
    %588 = vmatpush.bf16.msra.mxu0 %v456
    %589 = vmatpush.bf16.msra.mxu0 %v455
    %590 = vmatpush.bf16.msra.mxu0 %v454
    %591 = vmatpush.bf16.msra.mxu0 %v453
    %592 = vmatpush.bf16.msra.mxu0 %v452
    %593 = vmatmul.bf16.gmra.mxu0 %v49
    %v594 = vpop.f32.mrf.mxu0
    %v595 = vadd.f32 %v582, %v594
    %v596 = vpop.f32.mrf.mxu0
    %597 = vdwg.mxu0
    %598 = vmatpush.bf16.msra.mxu0 %v467
    %599 = vmatpush.bf16.msra.mxu0 %v466
    %600 = vmatpush.bf16.msra.mxu0 %v465
    %601 = vmatpush.bf16.msra.mxu0 %v464
    %602 = vmatpush.bf16.msra.mxu0 %v463
    %603 = vmatpush.bf16.msra.mxu0 %v462
    %604 = vmatpush.bf16.msra.mxu0 %v461
    %605 = vmatpush.bf16.msra.mxu0 %v460
    %606 = vmatmul.bf16.gmra.mxu0 %v50
    %v607 = vpop.f32.mrf.mxu0
    %v608 = vadd.f32 %v595, %v607
    %v609 = vpop.f32.mrf.mxu0
    %610 = vdwg.mxu0
    %611 = vmatpush.bf16.msra.mxu0 %v475
    %612 = vmatpush.bf16.msra.mxu0 %v474
    %613 = vmatpush.bf16.msra.mxu0 %v473
    %614 = vmatpush.bf16.msra.mxu0 %v472
    %615 = vmatpush.bf16.msra.mxu0 %v471
    %616 = vmatpush.bf16.msra.mxu0 %v470
    %617 = vmatpush.bf16.msra.mxu0 %v469
    %618 = vmatpush.bf16.msra.mxu0 %v468
    %619 = vmatmul.bf16.gmra.mxu0 %v51
    %v620 = vpop.f32.mrf.mxu0
    %v621 = vadd.f32 %v608, %v620
    %v622 = vpop.f32.mrf.mxu0
    %623 = vdwg.mxu0
    %624 = vmatpush.bf16.msra.mxu0 %v483
    %625 = vmatpush.bf16.msra.mxu0 %v482
    %626 = vmatpush.bf16.msra.mxu0 %v481
    %627 = vmatpush.bf16.msra.mxu0 %v480
    %628 = vmatpush.bf16.msra.mxu0 %v479
    %629 = vmatpush.bf16.msra.mxu0 %v478
    %630 = vmatpush.bf16.msra.mxu0 %v477
    %631 = vmatpush.bf16.msra.mxu0 %v476
    %632 = vmatmul.bf16.gmra.mxu0 %v52
    %v633 = vpop.f32.mrf.mxu0
    %v634 = vadd.f32 %v621, %v633
    %v635 = vpop.f32.mrf.mxu0
    %636 = vdwg.mxu0
    %637 = vmatpush.bf16.msra.mxu0 %v491
    %638 = vmatpush.bf16.msra.mxu0 %v490
    %639 = vmatpush.bf16.msra.mxu0 %v489
    %640 = vmatpush.bf16.msra.mxu0 %v488
    %641 = vmatpush.bf16.msra.mxu0 %v487
    %642 = vmatpush.bf16.msra.mxu0 %v486
    %643 = vmatpush.bf16.msra.mxu0 %v485
    %644 = vmatpush.bf16.msra.mxu0 %v484
    %645 = vmatmul.bf16.gmra.mxu0 %v53
    %v646 = vpop.f32.mrf.mxu0
    %v647 = vadd.f32 %v634, %v646
    %v648 = vpop.f32.mrf.mxu0
    %649 = vdwg.mxu0
    %650 = vmatpush.bf16.msra.mxu0 %v499
    %651 = vmatpush.bf16.msra.mxu0 %v498
    %652 = vmatpush.bf16.msra.mxu0 %v497
    %653 = vmatpush.bf16.msra.mxu0 %v496
    %654 = vmatpush.bf16.msra.mxu0 %v495
    %655 = vmatpush.bf16.msra.mxu0 %v494
    %656 = vmatpush.bf16.msra.mxu0 %v493
    %657 = vmatpush.bf16.msra.mxu0 %v492
    %658 = vmatmul.bf16.gmra.mxu0 %v54
    %v659 = vpop.f32.mrf.mxu0
    %v660 = vadd.f32 %v647, %v659
    %v661 = vpop.f32.mrf.mxu0
    %662 = vdwg.mxu0
    %663 = vmatpush.bf16.msra.mxu0 %v507
    %664 = vmatpush.bf16.msra.mxu0 %v506
    %665 = vmatpush.bf16.msra.mxu0 %v505
    %666 = vmatpush.bf16.msra.mxu0 %v504
    %667 = vmatpush.bf16.msra.mxu0 %v503
    %668 = vmatpush.bf16.msra.mxu0 %v502
    %669 = vmatpush.bf16.msra.mxu0 %v501
    %670 = vmatpush.bf16.msra.mxu0 %v500
    %671 = vmatmul.bf16.gmra.mxu0 %v55
    %v672 = vpop.f32.mrf.mxu0
    %v673 = vadd.f32 %v660, %v672
    %v674 = vpop.f32.mrf.mxu0
    %675 = vdwg.mxu0
    %v676 = vmax.f32 %v673, 0.0
    %v677 = vpack.c.bf16 %v676, %v676
    %v678 = vld [vmem:[%s3] sm:$0xff]
    %v679 = vld [vmem:[%s3 + $0x8] sm:$0xff]
    %v680 = vld [vmem:[%s3 + $0x10] sm:$0xff]
    %v681 = vld [vmem:[%s3 + $0x18] sm:$0xff]
    %v682 = vld [vmem:[%s4] sm:$0x3]
    %v684 = vperm.slane %v682, 0
    %v685 = vperm.slane %v682, 1
    %v692 = vunpack.c.l.b16 %v678
    %v693 = vunpack.c.h.b16 %v678
    %v694 = vunpack.c.l.b16 %v679
    %v695 = vunpack.c.h.b16 %v679
    %v696 = vunpack.c.l.b16 %v680
    %v697 = vunpack.c.h.b16 %v680
    %v698 = vunpack.c.l.b16 %v681
    %v699 = vunpack.c.h.b16 %v681
    %v700 = vpack.c.b16 %v694, %v692
    %v701 = vpack.c.b16 %v695, %v693
    %v702 = vpack.c.b16 %v698, %v696
    %v703 = vpack.c.b16 %v699, %v697
    %vm708 = vcmask 261120
    %v710 = vsel %vm708, %v677, 0
    %712 = vmatpush.bf16.msra.mxu0 0
    %713 = vmatpush.bf16.msra.mxu0 0
    %714 = vmatpush.bf16.msra.mxu0 0
    %715 = vmatpush.bf16.msra.mxu0 0
    %716 = vmatpush.bf16.msra.mxu0 0
    %717 = vmatpush.bf16.msra.mxu0 0
    %718 = vmatpush.bf16.msra.mxu0 %v702
    %719 = vmatpush.bf16.msra.mxu0 %v700
    %720 = vmatmul.bf16.gmra.mxu0 %v710
    %v721 = vpop.f32.mrf.mxu0
    %v722 = vadd.f32 %v684, %v721
    %v723 = vpop.f32.mrf.mxu0
    %724 = vdwg.mxu0
    %725 = vmatpush.bf16.msra.mxu0 0
    %726 = vmatpush.bf16.msra.mxu0 0
    %727 = vmatpush.bf16.msra.mxu0 0
    %728 = vmatpush.bf16.msra.mxu0 0
    %729 = vmatpush.bf16.msra.mxu0 0
    %730 = vmatpush.bf16.msra.mxu0 0
    %731 = vmatpush.bf16.msra.mxu0 %v703
    %732 = vmatpush.bf16.msra.mxu0 %v701
    %733 = vmatmul.bf16.gmra.mxu0 %v710
    %v734 = vpop.f32.mrf.mxu0
    %v735 = vadd.f32 %v685, %v734
    %v736 = vpop.f32.mrf.mxu0
    %737 = vdwg.mxu0
    %v738 = vmul.f32 %v735, 0.5
    %v739 = vmul.f32 %v738, 1.442695
    %v740 = vpow.pop %v739
    %v741 = vld [vmem:[%s5] sm:$0x3]
    %v742 = vmul.f32 %v740, %v741
    %v743 = vadd.f32 %v722, %v742
    %744 = vst [vmem:[#allocation2] sm:$0x3] %v743
    // Predicated region
    $region26: #{tpu_custom_call.1} parent=1 // pred_check
      _
    $region27: #{tpu_custom_call.1} parent=1 // pred_check_branch
      %746 = sbr.rel (0) target = $region29
    $region28: #{tpu_custom_call.1} parent=1 // pred_region
      %748 = vsyncadd [#allocation3], 0
      %s750 = sshll.u32 [#allocation2], 4
      %s751 = int_to_ptr.vmem [resolvable:$true] %s750
      %s752 = sshll.u32 %s6, 4
      %s753 = int_to_ptr.hbm [resolvable:$true] %s752
      %755 = dma.vmem_to_hbm [thread:$0]  %s751, 32, %s753, [#allocation3]
    $region29: #{tpu_custom_call.1} parent=1 // pred_fallthru
      _
    // Predicated region
    $region30: #{tpu_custom_call.1} parent=1 // pred_check
      _
    $region31: #{tpu_custom_call.1} parent=1 // pred_check_branch
      %757 = sbr.rel (0) target = $region33
    $region32: #{tpu_custom_call.1} parent=1 // pred_region
      %759 = dma.done [#allocation3], 32
    $region33: #{tpu_custom_call.1} parent=1 // pred_fallthru
      _
    %760 = vsyncpa [#allocation3], 1

</llo_original>
